<compile_context>
chip_gen: v7x
topology: tpu7x:2x2x1
jax: 0.10.0
libtpu: 0.0.40
codegen_flags: <defaults>
</compile_context>

<pallas_src>
import functools

import jax
import jax.numpy as jnp
from jax.experimental import pallas as pl
from jax.experimental.pallas import tpu as pltpu

# ---- CFG (small synthetic configuration, mirrors the tutorial's CFG fields) ----
TEMPERATURE = 1.0        # CFG.temperature
IMAGE_EMBEDDING = 256    # CFG.image_embedding (lane-dense stand-in for ResNet50's 2048)
TEXT_EMBEDDING = 128     # CFG.text_embedding  (lane-dense stand-in for DistilBERT's 768)
PROJECTION_DIM = 128     # CFG.projection_dim  (lane-dense stand-in for 256)
LN_EPS = 1e-5            # nn.LayerNorm default eps


# ----------------------------------------------------------------------------- #
# Fused kernel: image-encoder dense + both ProjectionHeads + contrastive loss.
# ----------------------------------------------------------------------------- #
def _projection_head_math(x, wp, bp, wf, bf_, gamma, beta):
    """projected = x@Wp+bp ; h = GELU(projected) ; h = h@Wf+bf ;
    h = dropout(h) (identity in eval) ; h = h + projected ; out = LayerNorm(h).

    Matmul operands go to the MXU in bf16 with f32 accumulation; all elementwise
    math stays in f32 (v5e has no bf16 VPU/EUP path)."""
    x16 = x.astype(jnp.bfloat16)
    projected = jnp.dot(x16, wp, preferred_element_type=jnp.float32) + bp
    # TODO(synk): nn.GELU() defaults to the exact erf GELU; tanh approximation is
    # used here for guaranteed Mosaic lowering (max abs error ~1e-3).
    h = jax.nn.gelu(projected, approximate=True)
    h = jnp.dot(h.astype(jnp.bfloat16), wf, preferred_element_type=jnp.float32) + bf_
    h = h + projected                                  # dropout == identity (eval)
    mean = jnp.mean(h, axis=-1, keepdims=True)
    var = jnp.mean((h - mean) ** 2, axis=-1, keepdims=True)
    return (h - mean) * jax.lax.rsqrt(var + LN_EPS) * gamma + beta


def _matmul_nt(a, b):  # a [M,K], b [N,K] -> a @ b.T on the MXU (f32 accumulation)
    return jax.lax.dot_general(
        a, b, (((1,), (1,)), ((), ())), preferred_element_type=jnp.float32
    )


def _row_log_softmax(z):
    zmax = jnp.max(z, axis=-1, keepdims=True)
    zs = z - zmax
    return zs - jnp.log(jnp.sum(jnp.exp(zs), axis=-1, keepdims=True))


def _clip_fused_kernel(
    x_ref, we_ref, be_ref, tf_ref,
    wpi_ref, wfi_ref, wpt_ref, wft_ref, vec_ref,
    o_ref, *, temperature, inv_temperature,
):
    # ---- unpack the stacked per-head bias/LN vectors (static row slices) ----
    # rows 0..3: image head (bp, bf, gamma, beta); rows 4..7: text head.
    vecs = vec_ref[...]                                           # [8, D] f32
    bpi, bfi, gi, bti = vecs[0:1], vecs[1:2], vecs[2:3], vecs[3:4]
    bpt, bft, gt, btt = vecs[4:5], vecs[5:6], vecs[6:7], vecs[7:8]

    # ---- synthetic image encoder: one dense layer over the flattened NCHW image ----
    image_features = (
        jnp.dot(x_ref[...], we_ref[...], preferred_element_type=jnp.float32)
        + be_ref[...]
    )

    # ---- projection heads (VMEM-resident, no HBM round trip) ----
    img_emb = _projection_head_math(
        image_features, wpi_ref[...], bpi, wfi_ref[...], bfi, gi, bti)
    txt_emb = _projection_head_math(
        tf_ref[...], wpt_ref[...], bpt, wft_ref[...], bft, gt, btt)

    B = img_emb.shape[0]
    img16 = img_emb.astype(jnp.bfloat16)
    txt16 = txt_emb.astype(jnp.bfloat16)

    # ---- contrastive loss ----
    #   logits  = text @ image.T / T
    #   targets = softmax((image@image.T + text@text.T)/2 * T, dim=-1)
    #   texts_loss  = CE(logits,   targets)  (row-wise)
    #   images_loss = CE(logits.T, targets.T)
    #   loss = mean((images_loss + texts_loss)/2)
    logits = _matmul_nt(txt16, img16) * inv_temperature          # [B, B]
    logits_t = _matmul_nt(img16, txt16) * inv_temperature        # == logits.T (no XLU transpose)
    img_sim = _matmul_nt(img16, img16)                           # [B, B]
    txt_sim = _matmul_nt(txt16, txt16)                           # [B, B]

    tgt_logits = (img_sim + txt_sim) * (0.5 * temperature)
    tmax = jnp.max(tgt_logits, axis=-1, keepdims=True)
    texp = jnp.exp(tgt_logits - tmax)
    targets = texp / jnp.sum(texp, axis=-1, keepdims=True)       # exact softmax

    lsm_rows = _row_log_softmax(logits)                          # texts branch
    lsm_t = _row_log_softmax(logits_t)                           # images branch (row-lsm of logits.T)

    # texts_loss total: sum_{i,j} -targets[i,j] * lsm_rows[i,j]
    texts_sum = jnp.sum(targets * lsm_rows)

    # images_loss total: sum_{i,j} -targets.T[i,j] * lsm_t[i,j]
    #                  = -trace(targets @ lsm_t)   (tiny f32 matmul on the idle MXU,
    #                    diagonal picked with an iota mask -- no transpose / axis-0 ops)
    prod = jnp.dot(targets, lsm_t, preferred_element_type=jnp.float32)   # [B, B]
    ri = jax.lax.broadcasted_iota(jnp.int32, prod.shape, 0)
    ci = jax.lax.broadcasted_iota(jnp.int32, prod.shape, 1)
    images_sum = jnp.sum(jnp.where(ri == ci, prod, 0.0))

    # loss.mean() over B rows of (images_loss + texts_loss)/2  -> single SMEM scalar.
    o_ref[0, 0] = -(texts_sum + images_sum) * (0.5 / B)


def clip_fused(x_flat, text_features, params, temperature):
    """Single pallas_call running encoder-dense + both projection heads + loss."""
    ie = params["img_enc_w"].shape[1]
    ip, tp = params["img_proj"], params["txt_proj"]
    bf16 = jnp.bfloat16

    # Pack the 8 tiny [D] vectors into one [8, D] operand (one DMA instead of 12).
    head_vecs = jnp.stack(
        [ip["bp"], ip["bf"], ip["gamma"], ip["beta"],
         tp["bp"], tp["bf"], tp["gamma"], tp["beta"]], axis=0
    ).astype(jnp.float32)                                         # [8, PROJECTION_DIM]

    inputs = (
        x_flat.astype(bf16),                                      # [B, C*H*W]
        params["img_enc_w"].astype(bf16),                         # [C*H*W, IE]
        params["img_enc_b"].reshape(1, ie),                       # f32 (post-matmul add)
        text_features.astype(bf16),                               # [B, TE]
        ip["wp"].astype(bf16), ip["wf"].astype(bf16),
        tp["wp"].astype(bf16), tp["wf"].astype(bf16),
        head_vecs,                                                # [8, D] f32
    )

    def vmem_spec(shape):
        return pl.BlockSpec(shape, lambda i: (0,) * len(shape))

    out = pl.pallas_call(
        functools.partial(
            _clip_fused_kernel,
            temperature=temperature,
            inv_temperature=1.0 / temperature,
        ),
        out_shape=jax.ShapeDtypeStruct((1, 1), jnp.float32),
        grid=(1,),
        in_specs=[vmem_spec(a.shape) for a in inputs],
        out_specs=pl.BlockSpec(memory_space=pltpu.MemorySpace.SMEM),  # scalar store, no VMEM tile
    )(*inputs)
    return out[0, 0]


# ----------------------------------------------------------------------------- #
# Parameters & full forward
# ----------------------------------------------------------------------------- #
def _init_projection_head(key, embedding_dim, projection_dim):
    k1, k2 = jax.random.split(key)
    return {
        "wp": 0.02 * jax.random.normal(k1, (embedding_dim, projection_dim), jnp.float32),
        "bp": jnp.zeros((projection_dim,), jnp.float32),
        "wf": 0.02 * jax.random.normal(k2, (projection_dim, projection_dim), jnp.float32),
        "bf": jnp.zeros((projection_dim,), jnp.float32),
        "gamma": jnp.ones((projection_dim,), jnp.float32),
        "beta": jnp.zeros((projection_dim,), jnp.float32),
    }


def init_params(key, *, in_features, vocab_size):
    k1, k2, k3, k4 = jax.random.split(key, 4)
    return {
        "img_enc_w": 0.02 * jax.random.normal(k1, (in_features, IMAGE_EMBEDDING), jnp.float32),
        "img_enc_b": jnp.zeros((IMAGE_EMBEDDING,), jnp.float32),
        "tok_emb": 0.02 * jax.random.normal(k2, (vocab_size, TEXT_EMBEDDING), jnp.float32),
        "img_proj": _init_projection_head(k3, IMAGE_EMBEDDING, PROJECTION_DIM),
        "txt_proj": _init_projection_head(k4, TEXT_EMBEDDING, PROJECTION_DIM),
    }


def clip_forward(params, image, input_ids, attention_mask):
    B = image.shape[0]

    # ---- synthetic image encoder preprocessing ----
    # TODO(synk): real ImageEncoder is a pretrained timm ResNet50; approximated by
    # a single dense layer over the flattened NCHW image (inside the fused kernel).
    x_flat = image.reshape(B, -1)

    # ---- synthetic text encoder ----
    # TODO(synk): real TextEncoder is pretrained DistilBERT; approximated by an
    # embedding lookup + attention-mask-weighted mean pool (plain-JAX glue: the
    # token gather has no clean Pallas equivalent at this scale).
    emb = jnp.take(params["tok_emb"], input_ids, axis=0)          # [B, S, E_text]
    m = attention_mask.astype(jnp.float32)[..., None]             # [B, S, 1]
    text_features = jnp.sum(emb * m, axis=1) / jnp.maximum(jnp.sum(m, axis=1), 1.0)

    # ---- fused Pallas kernel: encoder dense + projection heads + contrastive loss ----
    return clip_fused(x_flat, text_features, params, TEMPERATURE)


if __name__ == "__main__":
    key = jax.random.PRNGKey(0)
    B, C, H, W, S, VOCAB = 8, 4, 16, 16, 8, 100

    k_img, k_ids, k_mask, k_params = jax.random.split(key, 4)
    image = jax.random.normal(k_img, (B, C, H, W), jnp.float32)          # NCHW
    input_ids = jax.random.randint(k_ids, (B, S), 0, VOCAB, jnp.int32)
    attention_mask = (jax.random.uniform(k_mask, (B, S)) > 0.2).astype(jnp.float32)
    attention_mask = attention_mask.at[:, 0].set(1.0)                    # >=1 valid token

    params = init_params(k_params, in_features=C * H * W, vocab_size=VOCAB)

    loss = clip_forward(params, image, input_ids, attention_mask)
    loss = jax.block_until_ready(loss)
    assert loss.shape == () and bool(jnp.isfinite(loss))
    print("KERNEL_OK")
</pallas_src>

<mosaic_0001>
module attributes {stable_mosaic.version = 11 : i64} {
  func.func @_clip_fused_kernel(%arg0: i32, %arg1: memref<8x1024xbf16, #tpu.memory_space<vmem>>, %arg2: memref<1024x256xbf16, #tpu.memory_space<vmem>>, %arg3: memref<1x256xf32, #tpu.memory_space<vmem>>, %arg4: memref<8x128xbf16, #tpu.memory_space<vmem>>, %arg5: memref<256x128xbf16, #tpu.memory_space<vmem>>, %arg6: memref<128x128xbf16, #tpu.memory_space<vmem>>, %arg7: memref<128x128xbf16, #tpu.memory_space<vmem>>, %arg8: memref<128x128xbf16, #tpu.memory_space<vmem>>, %arg9: memref<8x128xf32, #tpu.memory_space<vmem>>, %arg10: memref<1x1xf32, #tpu.memory_space<smem>>) attributes {dimension_semantics = [#tpu.dimension_semantics<arbitrary>], iteration_bounds = array<i64: 1>, scalar_prefetch = 0 : i64, scratch_operands = 0 : i64, tpu.core_type = #tpu.core_type<tc>, window_params = [{pipeline_mode = #tpu.pipeline_mode<synchronous>, transform_indices = @transform_0, window_bounds = array<i64: 8, 1024>}, {pipeline_mode = #tpu.pipeline_mode<synchronous>, transform_indices = @transform_1, window_bounds = array<i64: 1024, 256>}, {pipeline_mode = #tpu.pipeline_mode<synchronous>, transform_indices = @transform_2, window_bounds = array<i64: 1, 256>}, {pipeline_mode = #tpu.pipeline_mode<synchronous>, transform_indices = @transform_3, window_bounds = array<i64: 8, 128>}, {pipeline_mode = #tpu.pipeline_mode<synchronous>, transform_indices = @transform_4, window_bounds = array<i64: 256, 128>}, {pipeline_mode = #tpu.pipeline_mode<synchronous>, transform_indices = @transform_5, window_bounds = array<i64: 128, 128>}, {pipeline_mode = #tpu.pipeline_mode<synchronous>, transform_indices = @transform_6, window_bounds = array<i64: 128, 128>}, {pipeline_mode = #tpu.pipeline_mode<synchronous>, transform_indices = @transform_7, window_bounds = array<i64: 128, 128>}, {pipeline_mode = #tpu.pipeline_mode<synchronous>, transform_indices = @transform_8, window_bounds = array<i64: 8, 128>}, {transform_indices = @transform_9, window_bounds = array<i64: 1, 1>}]} {
    %c0 = arith.constant 0 : index
    %c0_0 = arith.constant 0 : index
    %0 = vector.load %arg9[%c0, %c0_0] : memref<8x128xf32, #tpu.memory_space<vmem>>, vector<8x128xf32>
    %1 = vector.extract_strided_slice %0 {offsets = [0, 0], sizes = [1, 128], strides = [1, 1]} : vector<8x128xf32> to vector<1x128xf32>
    %2 = vector.extract_strided_slice %0 {offsets = [1, 0], sizes = [1, 128], strides = [1, 1]} : vector<8x128xf32> to vector<1x128xf32>
    %3 = vector.extract_strided_slice %0 {offsets = [2, 0], sizes = [1, 128], strides = [1, 1]} : vector<8x128xf32> to vector<1x128xf32>
    %4 = vector.extract_strided_slice %0 {offsets = [3, 0], sizes = [1, 128], strides = [1, 1]} : vector<8x128xf32> to vector<1x128xf32>
    %5 = vector.extract_strided_slice %0 {offsets = [4, 0], sizes = [1, 128], strides = [1, 1]} : vector<8x128xf32> to vector<1x128xf32>
    %6 = vector.extract_strided_slice %0 {offsets = [5, 0], sizes = [1, 128], strides = [1, 1]} : vector<8x128xf32> to vector<1x128xf32>
    %7 = vector.extract_strided_slice %0 {offsets = [6, 0], sizes = [1, 128], strides = [1, 1]} : vector<8x128xf32> to vector<1x128xf32>
    %8 = vector.extract_strided_slice %0 {offsets = [7, 0], sizes = [1, 128], strides = [1, 1]} : vector<8x128xf32> to vector<1x128xf32>
    %c0_1 = arith.constant 0 : index
    %c0_2 = arith.constant 0 : index
    %9 = vector.load %arg1[%c0_1, %c0_2] : memref<8x1024xbf16, #tpu.memory_space<vmem>>, vector<8x1024xbf16>
    %c0_3 = arith.constant 0 : index
    %c0_4 = arith.constant 0 : index
    %10 = vector.load %arg2[%c0_3, %c0_4] : memref<1024x256xbf16, #tpu.memory_space<vmem>>, vector<1024x256xbf16>
    %cst = arith.constant dense<0.000000e+00> : vector<8x256xf32>
    %11 = tpu.matmul %9, %10, %cst {dimension_numbers = #tpu.dot_dimension_numbers<[1], [0], [0], [1], [0, 0, 1, 1], [], []>} : vector<8x1024xbf16>, vector<1024x256xbf16>, vector<8x256xf32> -> vector<8x256xf32>
    %c0_5 = arith.constant 0 : index
    %c0_6 = arith.constant 0 : index
    %12 = vector.load %arg3[%c0_5, %c0_6] : memref<1x256xf32, #tpu.memory_space<vmem>>, vector<1x256xf32>
    %13 = vector.broadcast %12 : vector<1x256xf32> to vector<8x256xf32>
    %14 = arith.addf %11, %13 : vector<8x256xf32>
    %c0_7 = arith.constant 0 : index
    %c0_8 = arith.constant 0 : index
    %15 = vector.load %arg5[%c0_7, %c0_8] : memref<256x128xbf16, #tpu.memory_space<vmem>>, vector<256x128xbf16>
    %c0_9 = arith.constant 0 : index
    %c0_10 = arith.constant 0 : index
    %16 = vector.load %arg6[%c0_9, %c0_10] : memref<128x128xbf16, #tpu.memory_space<vmem>>, vector<128x128xbf16>
    %17 = arith.truncf %14 : vector<8x256xf32> to vector<8x256xbf16>
    %cst_11 = arith.constant dense<0.000000e+00> : vector<8x128xf32>
    %18 = tpu.matmul %17, %15, %cst_11 {dimension_numbers = #tpu.dot_dimension_numbers<[1], [0], [0], [1], [0, 0, 1, 1], [], []>} : vector<8x256xbf16>, vector<256x128xbf16>, vector<8x128xf32> -> vector<8x128xf32>
    %19 = vector.broadcast %1 : vector<1x128xf32> to vector<8x128xf32>
    %20 = arith.addf %18, %19 : vector<8x128xf32>
    %21 = arith.mulf %20, %20 : vector<8x128xf32>
    %22 = arith.mulf %20, %21 : vector<8x128xf32>
    %cst_12 = arith.constant 4.471500e-02 : f32
    %23 = vector.broadcast %cst_12 : f32 to vector<8x128xf32>
    %24 = arith.mulf %23, %22 : vector<8x128xf32>
    %25 = arith.addf %20, %24 : vector<8x128xf32>
    %cst_13 = arith.constant 0.797884583 : f32
    %26 = vector.broadcast %cst_13 : f32 to vector<8x128xf32>
    %27 = arith.mulf %26, %25 : vector<8x128xf32>
    %28 = math.tanh %27 : vector<8x128xf32>
    %cst_14 = arith.constant 1.000000e+00 : f32
    %29 = vector.broadcast %cst_14 : f32 to vector<8x128xf32>
    %30 = arith.addf %29, %28 : vector<8x128xf32>
    %cst_15 = arith.constant 5.000000e-01 : f32
    %31 = vector.broadcast %cst_15 : f32 to vector<8x128xf32>
    %32 = arith.mulf %31, %30 : vector<8x128xf32>
    %33 = arith.mulf %20, %32 : vector<8x128xf32>
    %34 = arith.truncf %33 : vector<8x128xf32> to vector<8x128xbf16>
    %cst_16 = arith.constant dense<0.000000e+00> : vector<8x128xf32>
    %35 = tpu.matmul %34, %16, %cst_16 {dimension_numbers = #tpu.dot_dimension_numbers<[1], [0], [0], [1], [0, 0, 1, 1], [], []>} : vector<8x128xbf16>, vector<128x128xbf16>, vector<8x128xf32> -> vector<8x128xf32>
    %36 = vector.broadcast %2 : vector<1x128xf32> to vector<8x128xf32>
    %37 = arith.addf %35, %36 : vector<8x128xf32>
    %38 = arith.addf %37, %20 : vector<8x128xf32>
    %cst_17 = arith.constant dense<0.000000e+00> : vector<8xf32>
    %39 = vector.multi_reduction <add>, %38, %cst_17 [1] : vector<8x128xf32> to vector<8xf32>
    %40 = vector.shape_cast %39 : vector<8xf32> to vector<8x1xf32>
    %cst_18 = arith.constant 1.280000e+02 : f32
    %41 = vector.broadcast %cst_18 : f32 to vector<8x1xf32>
    %42 = arith.divf %40, %41 : vector<8x1xf32>
    %43 = vector.broadcast %42 : vector<8x1xf32> to vector<8x128xf32>
    %44 = arith.subf %38, %43 : vector<8x128xf32>
    %45 = arith.mulf %44, %44 : vector<8x128xf32>
    %cst_19 = arith.constant dense<0.000000e+00> : vector<8xf32>
    %46 = vector.multi_reduction <add>, %45, %cst_19 [1] : vector<8x128xf32> to vector<8xf32>
    %47 = vector.shape_cast %46 : vector<8xf32> to vector<8x1xf32>
    %cst_20 = arith.constant 1.280000e+02 : f32
    %48 = vector.broadcast %cst_20 : f32 to vector<8x1xf32>
    %49 = arith.divf %47, %48 : vector<8x1xf32>
    %50 = vector.broadcast %42 : vector<8x1xf32> to vector<8x128xf32>
    %51 = arith.subf %38, %50 : vector<8x128xf32>
    %cst_21 = arith.constant 9.99999974E-6 : f32
    %52 = vector.broadcast %cst_21 : f32 to vector<8x1xf32>
    %53 = arith.addf %49, %52 : vector<8x1xf32>
    %54 = math.rsqrt %53 : vector<8x1xf32>
    %55 = vector.broadcast %54 : vector<8x1xf32> to vector<8x128xf32>
    %56 = arith.mulf %51, %55 : vector<8x128xf32>
    %57 = vector.broadcast %3 : vector<1x128xf32> to vector<8x128xf32>
    %58 = arith.mulf %56, %57 : vector<8x128xf32>
    %59 = vector.broadcast %4 : vector<1x128xf32> to vector<8x128xf32>
    %60 = arith.addf %58, %59 : vector<8x128xf32>
    %c0_22 = arith.constant 0 : index
    %c0_23 = arith.constant 0 : index
    %61 = vector.load %arg4[%c0_22, %c0_23] : memref<8x128xbf16, #tpu.memory_space<vmem>>, vector<8x128xbf16>
    %c0_24 = arith.constant 0 : index
    %c0_25 = arith.constant 0 : index
    %62 = vector.load %arg7[%c0_24, %c0_25] : memref<128x128xbf16, #tpu.memory_space<vmem>>, vector<128x128xbf16>
    %c0_26 = arith.constant 0 : index
    %c0_27 = arith.constant 0 : index
    %63 = vector.load %arg8[%c0_26, %c0_27] : memref<128x128xbf16, #tpu.memory_space<vmem>>, vector<128x128xbf16>
    %cst_28 = arith.constant dense<0.000000e+00> : vector<8x128xf32>
    %64 = tpu.matmul %61, %62, %cst_28 {dimension_numbers = #tpu.dot_dimension_numbers<[1], [0], [0], [1], [0, 0, 1, 1], [], []>} : vector<8x128xbf16>, vector<128x128xbf16>, vector<8x128xf32> -> vector<8x128xf32>
    %65 = vector.broadcast %5 : vector<1x128xf32> to vector<8x128xf32>
    %66 = arith.addf %64, %65 : vector<8x128xf32>
    %67 = arith.mulf %66, %66 : vector<8x128xf32>
    %68 = arith.mulf %66, %67 : vector<8x128xf32>
    %cst_29 = arith.constant 4.471500e-02 : f32
    %69 = vector.broadcast %cst_29 : f32 to vector<8x128xf32>
    %70 = arith.mulf %69, %68 : vector<8x128xf32>
    %71 = arith.addf %66, %70 : vector<8x128xf32>
    %cst_30 = arith.constant 0.797884583 : f32
    %72 = vector.broadcast %cst_30 : f32 to vector<8x128xf32>
    %73 = arith.mulf %72, %71 : vector<8x128xf32>
    %74 = math.tanh %73 : vector<8x128xf32>
    %cst_31 = arith.constant 1.000000e+00 : f32
    %75 = vector.broadcast %cst_31 : f32 to vector<8x128xf32>
    %76 = arith.addf %75, %74 : vector<8x128xf32>
    %cst_32 = arith.constant 5.000000e-01 : f32
    %77 = vector.broadcast %cst_32 : f32 to vector<8x128xf32>
    %78 = arith.mulf %77, %76 : vector<8x128xf32>
    %79 = arith.mulf %66, %78 : vector<8x128xf32>
    %80 = arith.truncf %79 : vector<8x128xf32> to vector<8x128xbf16>
    %cst_33 = arith.constant dense<0.000000e+00> : vector<8x128xf32>
    %81 = tpu.matmul %80, %63, %cst_33 {dimension_numbers = #tpu.dot_dimension_numbers<[1], [0], [0], [1], [0, 0, 1, 1], [], []>} : vector<8x128xbf16>, vector<128x128xbf16>, vector<8x128xf32> -> vector<8x128xf32>
    %82 = vector.broadcast %6 : vector<1x128xf32> to vector<8x128xf32>
    %83 = arith.addf %81, %82 : vector<8x128xf32>
    %84 = arith.addf %83, %66 : vector<8x128xf32>
    %cst_34 = arith.constant dense<0.000000e+00> : vector<8xf32>
    %85 = vector.multi_reduction <add>, %84, %cst_34 [1] : vector<8x128xf32> to vector<8xf32>
    %86 = vector.shape_cast %85 : vector<8xf32> to vector<8x1xf32>
    %cst_35 = arith.constant 1.280000e+02 : f32
    %87 = vector.broadcast %cst_35 : f32 to vector<8x1xf32>
    %88 = arith.divf %86, %87 : vector<8x1xf32>
    %89 = vector.broadcast %88 : vector<8x1xf32> to vector<8x128xf32>
    %90 = arith.subf %84, %89 : vector<8x128xf32>
    %91 = arith.mulf %90, %90 : vector<8x128xf32>
    %cst_36 = arith.constant dense<0.000000e+00> : vector<8xf32>
    %92 = vector.multi_reduction <add>, %91, %cst_36 [1] : vector<8x128xf32> to vector<8xf32>
    %93 = vector.shape_cast %92 : vector<8xf32> to vector<8x1xf32>
    %cst_37 = arith.constant 1.280000e+02 : f32
    %94 = vector.broadcast %cst_37 : f32 to vector<8x1xf32>
    %95 = arith.divf %93, %94 : vector<8x1xf32>
    %96 = vector.broadcast %88 : vector<8x1xf32> to vector<8x128xf32>
    %97 = arith.subf %84, %96 : vector<8x128xf32>
    %cst_38 = arith.constant 9.99999974E-6 : f32
    %98 = vector.broadcast %cst_38 : f32 to vector<8x1xf32>
    %99 = arith.addf %95, %98 : vector<8x1xf32>
    %100 = math.rsqrt %99 : vector<8x1xf32>
    %101 = vector.broadcast %100 : vector<8x1xf32> to vector<8x128xf32>
    %102 = arith.mulf %97, %101 : vector<8x128xf32>
    %103 = vector.broadcast %7 : vector<1x128xf32> to vector<8x128xf32>
    %104 = arith.mulf %102, %103 : vector<8x128xf32>
    %105 = vector.broadcast %8 : vector<1x128xf32> to vector<8x128xf32>
    %106 = arith.addf %104, %105 : vector<8x128xf32>
    %107 = arith.truncf %60 : vector<8x128xf32> to vector<8x128xbf16>
    %108 = arith.truncf %106 : vector<8x128xf32> to vector<8x128xbf16>
    %cst_39 = arith.constant dense<0.000000e+00> : vector<8x8xf32>
    %109 = tpu.matmul %108, %107, %cst_39 {dimension_numbers = #tpu.dot_dimension_numbers<[1], [1], [0], [0], [0, 0, 1, 0], [], []>} : vector<8x128xbf16>, vector<8x128xbf16>, vector<8x8xf32> -> vector<8x8xf32>
    %cst_40 = arith.constant 1.000000e+00 : f32
    %110 = vector.broadcast %cst_40 : f32 to vector<8x8xf32>
    %111 = arith.mulf %109, %110 : vector<8x8xf32>
    %cst_41 = arith.constant dense<0.000000e+00> : vector<8x8xf32>
    %112 = tpu.matmul %107, %108, %cst_41 {dimension_numbers = #tpu.dot_dimension_numbers<[1], [1], [0], [0], [0, 0, 1, 0], [], []>} : vector<8x128xbf16>, vector<8x128xbf16>, vector<8x8xf32> -> vector<8x8xf32>
    %cst_42 = arith.constant 1.000000e+00 : f32
    %113 = vector.broadcast %cst_42 : f32 to vector<8x8xf32>
    %114 = arith.mulf %112, %113 : vector<8x8xf32>
    %cst_43 = arith.constant dense<0.000000e+00> : vector<8x8xf32>
    %115 = tpu.matmul %107, %107, %cst_43 {dimension_numbers = #tpu.dot_dimension_numbers<[1], [1], [0], [0], [0, 0, 1, 0], [], []>} : vector<8x128xbf16>, vector<8x128xbf16>, vector<8x8xf32> -> vector<8x8xf32>
    %cst_44 = arith.constant dense<0.000000e+00> : vector<8x8xf32>
    %116 = tpu.matmul %108, %108, %cst_44 {dimension_numbers = #tpu.dot_dimension_numbers<[1], [1], [0], [0], [0, 0, 1, 0], [], []>} : vector<8x128xbf16>, vector<8x128xbf16>, vector<8x8xf32> -> vector<8x8xf32>
    %117 = arith.addf %115, %116 : vector<8x8xf32>
    %cst_45 = arith.constant 5.000000e-01 : f32
    %118 = vector.broadcast %cst_45 : f32 to vector<8x8xf32>
    %119 = arith.mulf %117, %118 : vector<8x8xf32>
    %cst_46 = arith.constant dense<0xFF800000> : vector<8xf32>
    %120 = vector.multi_reduction <maximumf>, %119, %cst_46 [1] : vector<8x8xf32> to vector<8xf32>
    %121 = vector.shape_cast %120 : vector<8xf32> to vector<8x1xf32>
    %122 = vector.broadcast %121 : vector<8x1xf32> to vector<8x8xf32>
    %123 = arith.subf %119, %122 : vector<8x8xf32>
    %124 = math.exp %123 : vector<8x8xf32>
    %cst_47 = arith.constant dense<0.000000e+00> : vector<8xf32>
    %125 = vector.multi_reduction <add>, %124, %cst_47 [1] : vector<8x8xf32> to vector<8xf32>
    %126 = vector.shape_cast %125 : vector<8xf32> to vector<8x1xf32>
    %127 = vector.broadcast %126 : vector<8x1xf32> to vector<8x8xf32>
    %128 = arith.divf %124, %127 : vector<8x8xf32>
    %cst_48 = arith.constant dense<0xFF800000> : vector<8xf32>
    %129 = vector.multi_reduction <maximumf>, %111, %cst_48 [1] : vector<8x8xf32> to vector<8xf32>
    %130 = vector.shape_cast %129 : vector<8xf32> to vector<8x1xf32>
    %131 = vector.broadcast %130 : vector<8x1xf32> to vector<8x8xf32>
    %132 = arith.subf %111, %131 : vector<8x8xf32>
    %133 = math.exp %132 : vector<8x8xf32>
    %cst_49 = arith.constant dense<0.000000e+00> : vector<8xf32>
    %134 = vector.multi_reduction <add>, %133, %cst_49 [1] : vector<8x8xf32> to vector<8xf32>
    %135 = vector.shape_cast %134 : vector<8xf32> to vector<8x1xf32>
    %136 = math.log %135 : vector<8x1xf32>
    %137 = vector.broadcast %136 : vector<8x1xf32> to vector<8x8xf32>
    %138 = arith.subf %132, %137 : vector<8x8xf32>
    %cst_50 = arith.constant dense<0xFF800000> : vector<8xf32>
    %139 = vector.multi_reduction <maximumf>, %114, %cst_50 [1] : vector<8x8xf32> to vector<8xf32>
    %140 = vector.shape_cast %139 : vector<8xf32> to vector<8x1xf32>
    %141 = vector.broadcast %140 : vector<8x1xf32> to vector<8x8xf32>
    %142 = arith.subf %114, %141 : vector<8x8xf32>
    %143 = math.exp %142 : vector<8x8xf32>
    %cst_51 = arith.constant dense<0.000000e+00> : vector<8xf32>
    %144 = vector.multi_reduction <add>, %143, %cst_51 [1] : vector<8x8xf32> to vector<8xf32>
    %145 = vector.shape_cast %144 : vector<8xf32> to vector<8x1xf32>
    %146 = math.log %145 : vector<8x1xf32>
    %147 = vector.broadcast %146 : vector<8x1xf32> to vector<8x8xf32>
    %148 = arith.subf %142, %147 : vector<8x8xf32>
    %149 = arith.mulf %128, %138 : vector<8x8xf32>
    %150 = vector.shape_cast %149 : vector<8x8xf32> to vector<1x8x8xf32>
    %cst_52 = arith.constant dense<0.000000e+00> : vector<1xf32>
    %151 = vector.multi_reduction <add>, %150, %cst_52 [1, 2] : vector<1x8x8xf32> to vector<1xf32>
    %152 = vector.shape_cast %151 : vector<1xf32> to vector<1x1x1xf32>
    %153 = vector.extract %152[0, 0, 0] : f32 from vector<1x1x1xf32>
    %cst_53 = arith.constant dense<0.000000e+00> : vector<8x8xf32>
    %154 = tpu.matmul %128, %148, %cst_53 {dimension_numbers = #tpu.dot_dimension_numbers<[1], [0], [0], [1], [0, 0, 1, 1], [], []>} : vector<8x8xf32>, vector<8x8xf32>, vector<8x8xf32> -> vector<8x8xf32>
    %155 = tpu.iota {dimensions = array<i32: 0>} : vector<8x8xi32>
    %156 = tpu.iota {dimensions = array<i32: 1>} : vector<8x8xi32>
    %157 = arith.cmpi eq, %155, %156 : vector<8x8xi32>
    %cst_54 = arith.constant 0.000000e+00 : f32
    %158 = vector.broadcast %cst_54 : f32 to vector<8x8xf32>
    %159 = arith.select %157, %154, %158 : vector<8x8xi1>, vector<8x8xf32>
    %160 = vector.shape_cast %159 : vector<8x8xf32> to vector<1x8x8xf32>
    %cst_55 = arith.constant dense<0.000000e+00> : vector<1xf32>
    %161 = vector.multi_reduction <add>, %160, %cst_55 [1, 2] : vector<1x8x8xf32> to vector<1xf32>
    %162 = vector.shape_cast %161 : vector<1xf32> to vector<1x1x1xf32>
    %163 = vector.extract %162[0, 0, 0] : f32 from vector<1x1x1xf32>
    %164 = arith.addf %153, %163 : f32
    %cst_56 = arith.constant 0.000000e+00 : f32
    %165 = arith.subf %cst_56, %164 : f32
    %cst_57 = arith.constant 6.250000e-02 : f32
    %166 = arith.mulf %165, %cst_57 : f32
    %c0_58 = arith.constant 0 : index
    %c0_59 = arith.constant 0 : index
    %167 = memref.load %arg10[%c0_58, %c0_59] : memref<1x1xf32, #tpu.memory_space<smem>>
    memref.store %166, %arg10[%c0_58, %c0_59] : memref<1x1xf32, #tpu.memory_space<smem>>
    return
  }
  func.func @transform_0(%arg0: i32) -> (i32, i32) {
    %c0_i32 = arith.constant 0 : i32
    %c0_i32_0 = arith.constant 0 : i32
    %c0_i32_1 = arith.constant 0 : i32
    return %c0_i32, %c0_i32_0 : i32, i32
  }
  func.func @transform_1(%arg0: i32) -> (i32, i32) {
    %c0_i32 = arith.constant 0 : i32
    %c0_i32_0 = arith.constant 0 : i32
    %c0_i32_1 = arith.constant 0 : i32
    return %c0_i32, %c0_i32_0 : i32, i32
  }
  func.func @transform_2(%arg0: i32) -> (i32, i32) {
    %c0_i32 = arith.constant 0 : i32
    %c0_i32_0 = arith.constant 0 : i32
    %c0_i32_1 = arith.constant 0 : i32
    return %c0_i32, %c0_i32_0 : i32, i32
  }
  func.func @transform_3(%arg0: i32) -> (i32, i32) {
    %c0_i32 = arith.constant 0 : i32
    %c0_i32_0 = arith.constant 0 : i32
    %c0_i32_1 = arith.constant 0 : i32
    return %c0_i32, %c0_i32_0 : i32, i32
  }
  func.func @transform_4(%arg0: i32) -> (i32, i32) {
    %c0_i32 = arith.constant 0 : i32
    %c0_i32_0 = arith.constant 0 : i32
    %c0_i32_1 = arith.constant 0 : i32
    return %c0_i32, %c0_i32_0 : i32, i32
  }
  func.func @transform_5(%arg0: i32) -> (i32, i32) {
    %c0_i32 = arith.constant 0 : i32
    %c0_i32_0 = arith.constant 0 : i32
    %c0_i32_1 = arith.constant 0 : i32
    return %c0_i32, %c0_i32_0 : i32, i32
  }
  func.func @transform_6(%arg0: i32) -> (i32, i32) {
    %c0_i32 = arith.constant 0 : i32
    %c0_i32_0 = arith.constant 0 : i32
    %c0_i32_1 = arith.constant 0 : i32
    return %c0_i32, %c0_i32_0 : i32, i32
  }
  func.func @transform_7(%arg0: i32) -> (i32, i32) {
    %c0_i32 = arith.constant 0 : i32
    %c0_i32_0 = arith.constant 0 : i32
    %c0_i32_1 = arith.constant 0 : i32
    return %c0_i32, %c0_i32_0 : i32, i32
  }
  func.func @transform_8(%arg0: i32) -> (i32, i32) {
    %c0_i32 = arith.constant 0 : i32
    %c0_i32_0 = arith.constant 0 : i32
    %c0_i32_1 = arith.constant 0 : i32
    return %c0_i32, %c0_i32_0 : i32, i32
  }
  func.func @transform_9(%arg0: i32) -> (i32, i32) {
    %c0_i32 = arith.constant 0 : i32
    %c0_i32_0 = arith.constant 0 : i32
    %c0_i32_1 = arith.constant 0 : i32
    return %c0_i32, %c0_i32_0 : i32, i32
  }
}

</mosaic_0001>

<llo_original>
// kernel: tpu_custom_call.1
$region0: #{tpu_custom_call.1}
  #allocation0 [shape = 'u32[]', space=smem, size = 0x4, offset = 0x4, fixed_abs, tag = 'smem constant byte address 0x4 - core index']
  #allocation1 [shape = 'u32[144,128]{1,0:T(1,128)}', space=vmem, size = 0x12000, scoped, tag = 'internal scratch']
  %s0 = inlined_call_operand.hbm [shape: bf16[8,1024], index: 0, kind: input, shape index: {}]
  %s1 = inlined_call_operand.hbm [shape: bf16[1024,256], index: 1, kind: input, shape index: {}]
  %s2 = inlined_call_operand.vmem [shape: f32[1,256], index: 2, kind: input, shape index: {}]
  %s3 = inlined_call_operand.vmem [shape: bf16[8,128], index: 3, kind: input, shape index: {}]
  %s4 = inlined_call_operand.hbm [shape: bf16[256,128], index: 4, kind: input, shape index: {}]
  %s5 = inlined_call_operand.hbm [shape: bf16[128,128], index: 5, kind: input, shape index: {}]
  %s6 = inlined_call_operand.hbm [shape: bf16[128,128], index: 6, kind: input, shape index: {}]
  %s7 = inlined_call_operand.hbm [shape: bf16[128,128], index: 7, kind: input, shape index: {}]
  %s8 = inlined_call_operand.vmem [shape: f32[8,128], index: 8, kind: input, shape index: {}]
  %s9 = inlined_call_operand.hbm [shape: f32[1,1], index: 9, kind: output, shape index: {}]
  %s10 = sld [smem:[#allocation0]]
  $region70: #{tpu_custom_call.1} parent=0
    _
  %s12 = ssub.s32 1, %s10
  %s13 = scalar_select 0, %s12, %s10
  $region1: #{tpu_custom_call.1} parent=0
    #allocation2 [shape = 'u8[16384]{0}', space=vmem, size = 0x4000, scoped, tag = 'input window, operand 0, single buffered']
    #allocation3 [shape = 's32[1]{0}', space=sflag, size = 0x4, scoped, tag = 'scoped memory for tpu_custom_call.1']
    #allocation4 [shape = 's32[1]{0}', space=sflag, size = 0x4, scoped, tag = 'scoped memory for tpu_custom_call.1']
    #allocation5 [shape = 'u8[524288]{0}', space=vmem, size = 0x80000, scoped, tag = 'input window, operand 1, single buffered']
    #allocation6 [shape = 's32[1]{0}', space=sflag, size = 0x4, scoped, tag = 'scoped memory for tpu_custom_call.1']
    #allocation7 [shape = 'u8[65536]{0}', space=vmem, size = 0x10000, scoped, tag = 'input window, operand 4, single buffered']
    #allocation8 [shape = 'u8[32768]{0}', space=vmem, size = 0x8000, scoped, tag = 'input window, operand 5, single buffered']
    #allocation9 [shape = 's32[1]{0}', space=sflag, size = 0x4, scoped, tag = 'scoped memory for tpu_custom_call.1']
    #allocation10 [shape = 'u8[32768]{0}', space=vmem, size = 0x8000, scoped, tag = 'input window, operand 6, single buffered']
    #allocation11 [shape = 'u8[32768]{0}', space=vmem, size = 0x8000, scoped, tag = 'input window, operand 7, single buffered']
    #allocation12 [shape = 's32[1]{0}', space=sflag, size = 0x4, scoped, tag = 'scoped memory for tpu_custom_call.1']
    #allocation13 [shape = 'u8[512]{0}', space=smem, size = 0x200, scoped, tag = 'output window, operand 0, single buffered']
    %14 = vsyncpa [#allocation3], 0
    %15 = vsyncpa [#allocation6], 0
    %16 = vsyncpa [#allocation9], 0
    %17 = vsyncpa [#allocation12], 0
    %18 = vsyncpa [#allocation4], 0
    // Predicated region
    $region2: #{tpu_custom_call.1} parent=1 // pred_check
      _
    $region3: #{tpu_custom_call.1} parent=1 // pred_check_branch
      %20 = sbr.rel (0) target = $region5
    $region4: #{tpu_custom_call.1} parent=1 // pred_region
      %s22 = ssub.s32 512, 512
      %23 = vsyncadd [#allocation3], %s22
      %s25 = sshll.u32 [#allocation2], 4
      %s26 = int_to_ptr.vmem [resolvable:$true] %s25
      %28 = dma.hbm_to_vmem [thread:$0]  %s0, 512, %s26, [#allocation3]
    $region5: #{tpu_custom_call.1} parent=1 // pred_fallthru
      _
    // Predicated region
    $region6: #{tpu_custom_call.1} parent=1 // pred_check
      _
    $region7: #{tpu_custom_call.1} parent=1 // pred_check_branch
      %30 = sbr.rel (0) target = $region9
    $region8: #{tpu_custom_call.1} parent=1 // pred_region
      %s32 = ssub.s32 16384, 16384
      %33 = vsyncadd [#allocation6], %s32
      %s34 = sshll.u32 [#allocation5], 4
      %s35 = int_to_ptr.vmem [resolvable:$true] %s34
      %40 = dma.hbm_to_vmem [thread:$0]  %s1, 16384, %s35, [#allocation6], 128, 128, 8
    $region9: #{tpu_custom_call.1} parent=1 // pred_fallthru
      _
    // Predicated region
    $region10: #{tpu_custom_call.1} parent=1 // pred_check
      _
    $region11: #{tpu_custom_call.1} parent=1 // pred_check_branch
      %42 = sbr.rel (0) target = $region13
    $region12: #{tpu_custom_call.1} parent=1 // pred_region
      _
    $region13: #{tpu_custom_call.1} parent=1 // pred_fallthru
      _
    // Predicated region
    $region14: #{tpu_custom_call.1} parent=1 // pred_check
      _
    $region15: #{tpu_custom_call.1} parent=1 // pred_check_branch
      %44 = sbr.rel (0) target = $region17
    $region16: #{tpu_custom_call.1} parent=1 // pred_region
      _
    $region17: #{tpu_custom_call.1} parent=1 // pred_fallthru
      _
    // Predicated region
    $region18: #{tpu_custom_call.1} parent=1 // pred_check
      _
    $region19: #{tpu_custom_call.1} parent=1 // pred_check_branch
      %46 = sbr.rel (0) target = $region21
    $region20: #{tpu_custom_call.1} parent=1 // pred_region
      %s48 = ssub.s32 2048, 2048
      %49 = vsyncadd [#allocation6], %s48
      %s50 = sshll.u32 [#allocation7], 4
      %s51 = int_to_ptr.vmem [resolvable:$true] %s50
      %56 = dma.hbm_to_vmem [thread:$0]  %s4, 2048, %s51, [#allocation6], 64, 64, 4
    $region21: #{tpu_custom_call.1} parent=1 // pred_fallthru
      _
    // Predicated region
    $region22: #{tpu_custom_call.1} parent=1 // pred_check
      _
    $region23: #{tpu_custom_call.1} parent=1 // pred_check_branch
      %58 = sbr.rel (0) target = $region25
    $region24: #{tpu_custom_call.1} parent=1 // pred_region
      %s60 = ssub.s32 1024, 1024
      %61 = vsyncadd [#allocation9], %s60
      %s62 = sshll.u32 [#allocation8], 4
      %s63 = int_to_ptr.vmem [resolvable:$true] %s62
      %68 = dma.hbm_to_vmem [thread:$0]  %s5, 1024, %s63, [#allocation9], 64, 64, 4
    $region25: #{tpu_custom_call.1} parent=1 // pred_fallthru
      _
    // Predicated region
    $region26: #{tpu_custom_call.1} parent=1 // pred_check
      _
    $region27: #{tpu_custom_call.1} parent=1 // pred_check_branch
      %70 = sbr.rel (0) target = $region29
    $region28: #{tpu_custom_call.1} parent=1 // pred_region
      %s72 = ssub.s32 1024, 1024
      %73 = vsyncadd [#allocation9], %s72
      %s74 = sshll.u32 [#allocation10], 4
      %s75 = int_to_ptr.vmem [resolvable:$true] %s74
      %80 = dma.hbm_to_vmem [thread:$0]  %s6, 1024, %s75, [#allocation9], 64, 64, 4
    $region29: #{tpu_custom_call.1} parent=1 // pred_fallthru
      _
    // Predicated region
    $region30: #{tpu_custom_call.1} parent=1 // pred_check
      _
    $region31: #{tpu_custom_call.1} parent=1 // pred_check_branch
      %82 = sbr.rel (0) target = $region33
    $region32: #{tpu_custom_call.1} parent=1 // pred_region
      %s84 = ssub.s32 1024, 1024
      %85 = vsyncadd [#allocation12], %s84
      %s86 = sshll.u32 [#allocation11], 4
      %s87 = int_to_ptr.vmem [resolvable:$true] %s86
      %92 = dma.hbm_to_vmem [thread:$0]  %s7, 1024, %s87, [#allocation12], 64, 64, 4
    $region33: #{tpu_custom_call.1} parent=1 // pred_fallthru
      _
    // Predicated region
    $region34: #{tpu_custom_call.1} parent=1 // pred_check
      _
    $region35: #{tpu_custom_call.1} parent=1 // pred_check_branch
      %94 = sbr.rel (0) target = $region37
    $region36: #{tpu_custom_call.1} parent=1 // pred_region
      _
    $region37: #{tpu_custom_call.1} parent=1 // pred_fallthru
      _
    // Predicated region
    $region38: #{tpu_custom_call.1} parent=1 // pred_check
      _
    $region39: #{tpu_custom_call.1} parent=1 // pred_check_branch
      %96 = sbr.rel (0) target = $region41
    $region40: #{tpu_custom_call.1} parent=1 // pred_region
      %97 = dma.done [#allocation3], 512
    $region41: #{tpu_custom_call.1} parent=1 // pred_fallthru
      _
    // Predicated region
    $region42: #{tpu_custom_call.1} parent=1 // pred_check
      _
    $region43: #{tpu_custom_call.1} parent=1 // pred_check_branch
      %99 = sbr.rel (0) target = $region45
    $region44: #{tpu_custom_call.1} parent=1 // pred_region
      %100 = dma.done [#allocation6], 16384
    $region45: #{tpu_custom_call.1} parent=1 // pred_fallthru
      _
    // Predicated region
    $region46: #{tpu_custom_call.1} parent=1 // pred_check
      _
    $region47: #{tpu_custom_call.1} parent=1 // pred_check_branch
      %102 = sbr.rel (0) target = $region49
    $region48: #{tpu_custom_call.1} parent=1 // pred_region
      %103 = dma.done [#allocation6], 2048
    $region49: #{tpu_custom_call.1} parent=1 // pred_fallthru
      _
    // Predicated region
    $region50: #{tpu_custom_call.1} parent=1 // pred_check
      _
    $region51: #{tpu_custom_call.1} parent=1 // pred_check_branch
      %105 = sbr.rel (0) target = $region53
    $region52: #{tpu_custom_call.1} parent=1 // pred_region
      %106 = dma.done [#allocation9], 1024
    $region53: #{tpu_custom_call.1} parent=1 // pred_fallthru
      _
    // Predicated region
    $region54: #{tpu_custom_call.1} parent=1 // pred_check
      _
    $region55: #{tpu_custom_call.1} parent=1 // pred_check_branch
      %108 = sbr.rel (0) target = $region57
    $region56: #{tpu_custom_call.1} parent=1 // pred_region
      %109 = dma.done [#allocation9], 1024
    $region57: #{tpu_custom_call.1} parent=1 // pred_fallthru
      _
    // Predicated region
    $region58: #{tpu_custom_call.1} parent=1 // pred_check
      _
    $region59: #{tpu_custom_call.1} parent=1 // pred_check_branch
      %111 = sbr.rel (0) target = $region61
    $region60: #{tpu_custom_call.1} parent=1 // pred_region
      %112 = dma.done [#allocation12], 1024
    $region61: #{tpu_custom_call.1} parent=1 // pred_fallthru
      _
    %v114 = vld [vmem:[%s8] sm:$0xff]
    %v115 = vld [vmem:[#allocation2] sm:$0xff]
    %v116 = vld [vmem:[#allocation2 + $0x8] sm:$0xff]
    %v117 = vld [vmem:[#allocation2 + $0x10] sm:$0xff]
    %v118 = vld [vmem:[#allocation2 + $0x18] sm:$0xff]
    %v119 = vld [vmem:[#allocation5] sm:$0xff]
    %v120 = vld [vmem:[#allocation5 + $0x8] sm:$0xff]
    %v121 = vld [vmem:[#allocation5 + $0x10] sm:$0xff]
    %v122 = vld [vmem:[#allocation5 + $0x18] sm:$0xff]
    %v123 = vld [vmem:[#allocation5 + $0x20] sm:$0xff]
    %v124 = vld [vmem:[#allocation5 + $0x28] sm:$0xff]
    %v125 = vld [vmem:[#allocation5 + $0x30] sm:$0xff]
    %v126 = vld [vmem:[#allocation5 + $0x38] sm:$0xff]
    %v127 = vld [vmem:[#allocation5 + $0x40] sm:$0xff]
    %v128 = vld [vmem:[#allocation5 + $0x48] sm:$0xff]
    %v129 = vld [vmem:[#allocation5 + $0x50] sm:$0xff]
    %v130 = vld [vmem:[#allocation5 + $0x58] sm:$0xff]
    %v131 = vld [vmem:[#allocation5 + $0x60] sm:$0xff]
    %v132 = vld [vmem:[#allocation5 + $0x68] sm:$0xff]
    %v133 = vld [vmem:[#allocation5 + $0x70] sm:$0xff]
    %v134 = vld [vmem:[#allocation5 + $0x78] sm:$0xff]
    %v135 = vld [vmem:[#allocation5 + $0x80] sm:$0xff]
    %v136 = vld [vmem:[#allocation5 + $0x88] sm:$0xff]
    %v137 = vld [vmem:[#allocation5 + $0x90] sm:$0xff]
    %v138 = vld [vmem:[#allocation5 + $0x98] sm:$0xff]
    %v139 = vld [vmem:[#allocation5 + $0xa0] sm:$0xff]
    %v140 = vld [vmem:[#allocation5 + $0xa8] sm:$0xff]
    %v141 = vld [vmem:[#allocation5 + $0xb0] sm:$0xff]
    %v142 = vld [vmem:[#allocation5 + $0xb8] sm:$0xff]
    %v143 = vld [vmem:[#allocation5 + $0xc0] sm:$0xff]
    %v144 = vld [vmem:[#allocation5 + $0xc8] sm:$0xff]
    %v145 = vld [vmem:[#allocation5 + $0xd0] sm:$0xff]
    %v146 = vld [vmem:[#allocation5 + $0xd8] sm:$0xff]
    %v147 = vld [vmem:[#allocation5 + $0xe0] sm:$0xff]
    %v148 = vld [vmem:[#allocation5 + $0xe8] sm:$0xff]
    %v149 = vld [vmem:[#allocation5 + $0xf0] sm:$0xff]
    %v150 = vld [vmem:[#allocation5 + $0xf8] sm:$0xff]
    %v151 = vld [vmem:[#allocation5 + $0x100] sm:$0xff]
    %v152 = vld [vmem:[#allocation5 + $0x108] sm:$0xff]
    %v153 = vld [vmem:[#allocation5 + $0x110] sm:$0xff]
    %v154 = vld [vmem:[#allocation5 + $0x118] sm:$0xff]
    %v155 = vld [vmem:[#allocation5 + $0x120] sm:$0xff]
    %v156 = vld [vmem:[#allocation5 + $0x128] sm:$0xff]
    %v157 = vld [vmem:[#allocation5 + $0x130] sm:$0xff]
    %v158 = vld [vmem:[#allocation5 + $0x138] sm:$0xff]
    %v159 = vld [vmem:[#allocation5 + $0x140] sm:$0xff]
    %v160 = vld [vmem:[#allocation5 + $0x148] sm:$0xff]
    %v161 = vld [vmem:[#allocation5 + $0x150] sm:$0xff]
    %v162 = vld [vmem:[#allocation5 + $0x158] sm:$0xff]
    %v163 = vld [vmem:[#allocation5 + $0x160] sm:$0xff]
    %v164 = vld [vmem:[#allocation5 + $0x168] sm:$0xff]
    %v165 = vld [vmem:[#allocation5 + $0x170] sm:$0xff]
    %v166 = vld [vmem:[#allocation5 + $0x178] sm:$0xff]
    %v167 = vld [vmem:[#allocation5 + $0x180] sm:$0xff]
    %v168 = vld [vmem:[#allocation5 + $0x188] sm:$0xff]
    %v169 = vld [vmem:[#allocation5 + $0x190] sm:$0xff]
    %v170 = vld [vmem:[#allocation5 + $0x198] sm:$0xff]
    %v171 = vld [vmem:[#allocation5 + $0x1a0] sm:$0xff]
    %v172 = vld [vmem:[#allocation5 + $0x1a8] sm:$0xff]
    %v173 = vld [vmem:[#allocation5 + $0x1b0] sm:$0xff]
    %v174 = vld [vmem:[#allocation5 + $0x1b8] sm:$0xff]
    %v175 = vld [vmem:[#allocation5 + $0x1c0] sm:$0xff]
    %v176 = vld [vmem:[#allocation5 + $0x1c8] sm:$0xff]
    %v177 = vld [vmem:[#allocation5 + $0x1d0] sm:$0xff]
    %v178 = vld [vmem:[#allocation5 + $0x1d8] sm:$0xff]
    %v179 = vld [vmem:[#allocation5 + $0x1e0] sm:$0xff]
    %v180 = vld [vmem:[#allocation5 + $0x1e8] sm:$0xff]
    %v181 = vld [vmem:[#allocation5 + $0x1f0] sm:$0xff]
    %v182 = vld [vmem:[#allocation5 + $0x1f8] sm:$0xff]
    %v183 = vld [vmem:[#allocation5 + $0x200] sm:$0xff]
    %v184 = vld [vmem:[#allocation5 + $0x208] sm:$0xff]
    %v185 = vld [vmem:[#allocation5 + $0x210] sm:$0xff]
    %v186 = vld [vmem:[#allocation5 + $0x218] sm:$0xff]
    %v187 = vld [vmem:[#allocation5 + $0x220] sm:$0xff]
    %v188 = vld [vmem:[#allocation5 + $0x228] sm:$0xff]
    %v189 = vld [vmem:[#allocation5 + $0x230] sm:$0xff]
    %v190 = vld [vmem:[#allocation5 + $0x238] sm:$0xff]
    %v191 = vld [vmem:[#allocation5 + $0x240] sm:$0xff]
    %v192 = vld [vmem:[#allocation5 + $0x248] sm:$0xff]
    %v193 = vld [vmem:[#allocation5 + $0x250] sm:$0xff]
    %v194 = vld [vmem:[#allocation5 + $0x258] sm:$0xff]
    %v195 = vld [vmem:[#allocation5 + $0x260] sm:$0xff]
    %v196 = vld [vmem:[#allocation5 + $0x268] sm:$0xff]
    %v197 = vld [vmem:[#allocation5 + $0x270] sm:$0xff]
    %v198 = vld [vmem:[#allocation5 + $0x278] sm:$0xff]
    %v199 = vld [vmem:[#allocation5 + $0x280] sm:$0xff]
    %v200 = vld [vmem:[#allocation5 + $0x288] sm:$0xff]
    %v201 = vld [vmem:[#allocation5 + $0x290] sm:$0xff]
    %v202 = vld [vmem:[#allocation5 + $0x298] sm:$0xff]
    %v203 = vld [vmem:[#allocation5 + $0x2a0] sm:$0xff]
    %v204 = vld [vmem:[#allocation5 + $0x2a8] sm:$0xff]
    %v205 = vld [vmem:[#allocation5 + $0x2b0] sm:$0xff]
    %v206 = vld [vmem:[#allocation5 + $0x2b8] sm:$0xff]
    %v207 = vld [vmem:[#allocation5 + $0x2c0] sm:$0xff]
    %v208 = vld [vmem:[#allocation5 + $0x2c8] sm:$0xff]
    %v209 = vld [vmem:[#allocation5 + $0x2d0] sm:$0xff]
    %v210 = vld [vmem:[#allocation5 + $0x2d8] sm:$0xff]
    %v211 = vld [vmem:[#allocation5 + $0x2e0] sm:$0xff]
    %v212 = vld [vmem:[#allocation5 + $0x2e8] sm:$0xff]
    %v213 = vld [vmem:[#allocation5 + $0x2f0] sm:$0xff]
    %v214 = vld [vmem:[#allocation5 + $0x2f8] sm:$0xff]
    %v215 = vld [vmem:[#allocation5 + $0x300] sm:$0xff]
    %v216 = vld [vmem:[#allocation5 + $0x308] sm:$0xff]
    %v217 = vld [vmem:[#allocation5 + $0x310] sm:$0xff]
    %v218 = vld [vmem:[#allocation5 + $0x318] sm:$0xff]
    %v219 = vld [vmem:[#allocation5 + $0x320] sm:$0xff]
    %v220 = vld [vmem:[#allocation5 + $0x328] sm:$0xff]
    %v221 = vld [vmem:[#allocation5 + $0x330] sm:$0xff]
    %v222 = vld [vmem:[#allocation5 + $0x338] sm:$0xff]
    %v223 = vld [vmem:[#allocation5 + $0x340] sm:$0xff]
    %v224 = vld [vmem:[#allocation5 + $0x348] sm:$0xff]
    %v225 = vld [vmem:[#allocation5 + $0x350] sm:$0xff]
    %v226 = vld [vmem:[#allocation5 + $0x358] sm:$0xff]
    %v227 = vld [vmem:[#allocation5 + $0x360] sm:$0xff]
    %v228 = vld [vmem:[#allocation5 + $0x368] sm:$0xff]
    %v229 = vld [vmem:[#allocation5 + $0x370] sm:$0xff]
    %v230 = vld [vmem:[#allocation5 + $0x378] sm:$0xff]
    %v231 = vld [vmem:[#allocation5 + $0x380] sm:$0xff]
    %v232 = vld [vmem:[#allocation5 + $0x388] sm:$0xff]
    %v233 = vld [vmem:[#allocation5 + $0x390] sm:$0xff]
    %v234 = vld [vmem:[#allocation5 + $0x398] sm:$0xff]
    %v235 = vld [vmem:[#allocation5 + $0x3a0] sm:$0xff]
    %v236 = vld [vmem:[#allocation5 + $0x3a8] sm:$0xff]
    %v237 = vld [vmem:[#allocation5 + $0x3b0] sm:$0xff]
    %v238 = vld [vmem:[#allocation5 + $0x3b8] sm:$0xff]
    %v239 = vld [vmem:[#allocation5 + $0x3c0] sm:$0xff]
    %v240 = vld [vmem:[#allocation5 + $0x3c8] sm:$0xff]
    %v241 = vld [vmem:[#allocation5 + $0x3d0] sm:$0xff]
    %v242 = vld [vmem:[#allocation5 + $0x3d8] sm:$0xff]
    %v243 = vld [vmem:[#allocation5 + $0x3e0] sm:$0xff]
    %v244 = vld [vmem:[#allocation5 + $0x3e8] sm:$0xff]
    %v245 = vld [vmem:[#allocation5 + $0x3f0] sm:$0xff]
    %v246 = vld [vmem:[#allocation5 + $0x3f8] sm:$0xff]
    %v247 = vld [vmem:[%s2] sm:$0x3]
    %v249 = vlaneseq
    %v250 = vshrl.u32 %v249, 7
    %v251 = vsub.s32 0, %v250
    %v252 = vrot.slane %v247, %v251
    %v253 = vlaneseq
    %v254 = vshrl.u32 %v253, 7
    %v255 = vsub.s32 1, %v254
    %v256 = vrot.slane %v247, %v255
    %v263 = vunpack.c.l.b16 %v115
    %v264 = vunpack.c.h.b16 %v115
    %v265 = vunpack.c.l.b16 %v116
    %v266 = vunpack.c.h.b16 %v116
    %v267 = vunpack.c.l.b16 %v117
    %v268 = vunpack.c.h.b16 %v117
    %v269 = vunpack.c.l.b16 %v118
    %v270 = vunpack.c.h.b16 %v118
    %v271 = vpack.c.b16 %v263, %v263
    %v272 = vpack.c.b16 %v264, %v264
    %v273 = vpack.c.b16 %v265, %v265
    %v274 = vpack.c.b16 %v266, %v266
    %v275 = vpack.c.b16 %v267, %v267
    %v276 = vpack.c.b16 %v268, %v268
    %v277 = vpack.c.b16 %v269, %v269
    %v278 = vpack.c.b16 %v270, %v270
    %v415 = vunpack.c.l.b16 %v119
    %v416 = vunpack.c.h.b16 %v119
    %v417 = vunpack.c.l.b16 %v120
    %v418 = vunpack.c.h.b16 %v120
    %v419 = vunpack.c.l.b16 %v121
    %v420 = vunpack.c.h.b16 %v121
    %v421 = vunpack.c.l.b16 %v122
    %v422 = vunpack.c.h.b16 %v122
    %v423 = vunpack.c.l.b16 %v123
    %v424 = vunpack.c.h.b16 %v123
    %v425 = vunpack.c.l.b16 %v124
    %v426 = vunpack.c.h.b16 %v124
    %v427 = vunpack.c.l.b16 %v125
    %v428 = vunpack.c.h.b16 %v125
    %v429 = vunpack.c.l.b16 %v126
    %v430 = vunpack.c.h.b16 %v126
    %v431 = vunpack.c.l.b16 %v127
    %v432 = vunpack.c.h.b16 %v127
    %v433 = vunpack.c.l.b16 %v128
    %v434 = vunpack.c.h.b16 %v128
    %v435 = vunpack.c.l.b16 %v129
    %v436 = vunpack.c.h.b16 %v129
    %v437 = vunpack.c.l.b16 %v130
    %v438 = vunpack.c.h.b16 %v130
    %v439 = vunpack.c.l.b16 %v131
    %v440 = vunpack.c.h.b16 %v131
    %v441 = vunpack.c.l.b16 %v132
    %v442 = vunpack.c.h.b16 %v132
    %v443 = vunpack.c.l.b16 %v133
    %v444 = vunpack.c.h.b16 %v133
    %v445 = vunpack.c.l.b16 %v134
    %v446 = vunpack.c.h.b16 %v134
    %v447 = vunpack.c.l.b16 %v135
    %v448 = vunpack.c.h.b16 %v135
    %v449 = vunpack.c.l.b16 %v136
    %v450 = vunpack.c.h.b16 %v136
    %v451 = vunpack.c.l.b16 %v137
    %v452 = vunpack.c.h.b16 %v137
    %v453 = vunpack.c.l.b16 %v138
    %v454 = vunpack.c.h.b16 %v138
    %v455 = vunpack.c.l.b16 %v139
    %v456 = vunpack.c.h.b16 %v139
    %v457 = vunpack.c.l.b16 %v140
    %v458 = vunpack.c.h.b16 %v140
    %v459 = vunpack.c.l.b16 %v141
    %v460 = vunpack.c.h.b16 %v141
    %v461 = vunpack.c.l.b16 %v142
    %v462 = vunpack.c.h.b16 %v142
    %v463 = vunpack.c.l.b16 %v143
    %v464 = vunpack.c.h.b16 %v143
    %v465 = vunpack.c.l.b16 %v144
    %v466 = vunpack.c.h.b16 %v144
    %v467 = vunpack.c.l.b16 %v145
    %v468 = vunpack.c.h.b16 %v145
    %v469 = vunpack.c.l.b16 %v146
    %v470 = vunpack.c.h.b16 %v146
    %v471 = vunpack.c.l.b16 %v147
    %v472 = vunpack.c.h.b16 %v147
    %v473 = vunpack.c.l.b16 %v148
    %v474 = vunpack.c.h.b16 %v148
    %v475 = vunpack.c.l.b16 %v149
    %v476 = vunpack.c.h.b16 %v149
    %v477 = vunpack.c.l.b16 %v150
    %v478 = vunpack.c.h.b16 %v150
    %v479 = vunpack.c.l.b16 %v151
    %v480 = vunpack.c.h.b16 %v151
    %v481 = vunpack.c.l.b16 %v152
    %v482 = vunpack.c.h.b16 %v152
    %v483 = vunpack.c.l.b16 %v153
    %v484 = vunpack.c.h.b16 %v153
    %v485 = vunpack.c.l.b16 %v154
    %v486 = vunpack.c.h.b16 %v154
    %v487 = vunpack.c.l.b16 %v155
    %v488 = vunpack.c.h.b16 %v155
    %v489 = vunpack.c.l.b16 %v156
    %v490 = vunpack.c.h.b16 %v156
    %v491 = vunpack.c.l.b16 %v157
    %v492 = vunpack.c.h.b16 %v157
    %v493 = vunpack.c.l.b16 %v158
    %v494 = vunpack.c.h.b16 %v158
    %v495 = vunpack.c.l.b16 %v159
    %v496 = vunpack.c.h.b16 %v159
    %v497 = vunpack.c.l.b16 %v160
    %v498 = vunpack.c.h.b16 %v160
    %v499 = vunpack.c.l.b16 %v161
    %v500 = vunpack.c.h.b16 %v161
    %v501 = vunpack.c.l.b16 %v162
    %v502 = vunpack.c.h.b16 %v162
    %v503 = vunpack.c.l.b16 %v163
    %v504 = vunpack.c.h.b16 %v163
    %v505 = vunpack.c.l.b16 %v164
    %v506 = vunpack.c.h.b16 %v164
    %v507 = vunpack.c.l.b16 %v165
    %v508 = vunpack.c.h.b16 %v165
    %v509 = vunpack.c.l.b16 %v166
    %v510 = vunpack.c.h.b16 %v166
    %v511 = vunpack.c.l.b16 %v167
    %v512 = vunpack.c.h.b16 %v167
    %v513 = vunpack.c.l.b16 %v168
    %v514 = vunpack.c.h.b16 %v168
    %v515 = vunpack.c.l.b16 %v169
    %v516 = vunpack.c.h.b16 %v169
    %v517 = vunpack.c.l.b16 %v170
    %v518 = vunpack.c.h.b16 %v170
    %v519 = vunpack.c.l.b16 %v171
    %v520 = vunpack.c.h.b16 %v171
    %v521 = vunpack.c.l.b16 %v172
    %v522 = vunpack.c.h.b16 %v172
    %v523 = vunpack.c.l.b16 %v173
    %v524 = vunpack.c.h.b16 %v173
    %v525 = vunpack.c.l.b16 %v174
    %v526 = vunpack.c.h.b16 %v174
    %v527 = vunpack.c.l.b16 %v175
    %v528 = vunpack.c.h.b16 %v175
    %v529 = vunpack.c.l.b16 %v176
    %v530 = vunpack.c.h.b16 %v176
    %v531 = vunpack.c.l.b16 %v177
    %v532 = vunpack.c.h.b16 %v177
    %v533 = vunpack.c.l.b16 %v178
    %v534 = vunpack.c.h.b16 %v178
    %v535 = vunpack.c.l.b16 %v179
    %v536 = vunpack.c.h.b16 %v179
    %v537 = vunpack.c.l.b16 %v180
    %v538 = vunpack.c.h.b16 %v180
    %v539 = vunpack.c.l.b16 %v181
    %v540 = vunpack.c.h.b16 %v181
    %v541 = vunpack.c.l.b16 %v182
    %v542 = vunpack.c.h.b16 %v182
    %v543 = vunpack.c.l.b16 %v183
    %v544 = vunpack.c.h.b16 %v183
    %v545 = vunpack.c.l.b16 %v184
    %v546 = vunpack.c.h.b16 %v184
    %v547 = vunpack.c.l.b16 %v185
    %v548 = vunpack.c.h.b16 %v185
    %v549 = vunpack.c.l.b16 %v186
    %v550 = vunpack.c.h.b16 %v186
    %v551 = vunpack.c.l.b16 %v187
    %v552 = vunpack.c.h.b16 %v187
    %v553 = vunpack.c.l.b16 %v188
    %v554 = vunpack.c.h.b16 %v188
    %v555 = vunpack.c.l.b16 %v189
    %v556 = vunpack.c.h.b16 %v189
    %v557 = vunpack.c.l.b16 %v190
    %v558 = vunpack.c.h.b16 %v190
    %v559 = vunpack.c.l.b16 %v191
    %v560 = vunpack.c.h.b16 %v191
    %v561 = vunpack.c.l.b16 %v192
    %v562 = vunpack.c.h.b16 %v192
    %v563 = vunpack.c.l.b16 %v193
    %v564 = vunpack.c.h.b16 %v193
    %v565 = vunpack.c.l.b16 %v194
    %v566 = vunpack.c.h.b16 %v194
    %v567 = vunpack.c.l.b16 %v195
    %v568 = vunpack.c.h.b16 %v195
    %v569 = vunpack.c.l.b16 %v196
    %v570 = vunpack.c.h.b16 %v196
    %v571 = vunpack.c.l.b16 %v197
    %v572 = vunpack.c.h.b16 %v197
    %v573 = vunpack.c.l.b16 %v198
    %v574 = vunpack.c.h.b16 %v198
    %v575 = vunpack.c.l.b16 %v199
    %v576 = vunpack.c.h.b16 %v199
    %v577 = vunpack.c.l.b16 %v200
    %v578 = vunpack.c.h.b16 %v200
    %v579 = vunpack.c.l.b16 %v201
    %v580 = vunpack.c.h.b16 %v201
    %v581 = vunpack.c.l.b16 %v202
    %v582 = vunpack.c.h.b16 %v202
    %v583 = vunpack.c.l.b16 %v203
    %v584 = vunpack.c.h.b16 %v203
    %v585 = vunpack.c.l.b16 %v204
    %v586 = vunpack.c.h.b16 %v204
    %v587 = vunpack.c.l.b16 %v205
    %v588 = vunpack.c.h.b16 %v205
    %v589 = vunpack.c.l.b16 %v206
    %v590 = vunpack.c.h.b16 %v206
    %v591 = vunpack.c.l.b16 %v207
    %v592 = vunpack.c.h.b16 %v207
    %v593 = vunpack.c.l.b16 %v208
    %v594 = vunpack.c.h.b16 %v208
    %v595 = vunpack.c.l.b16 %v209
    %v596 = vunpack.c.h.b16 %v209
    %v597 = vunpack.c.l.b16 %v210
    %v598 = vunpack.c.h.b16 %v210
    %v599 = vunpack.c.l.b16 %v211
    %v600 = vunpack.c.h.b16 %v211
    %v601 = vunpack.c.l.b16 %v212
    %v602 = vunpack.c.h.b16 %v212
    %v603 = vunpack.c.l.b16 %v213
    %v604 = vunpack.c.h.b16 %v213
    %v605 = vunpack.c.l.b16 %v214
    %v606 = vunpack.c.h.b16 %v214
    %v607 = vunpack.c.l.b16 %v215
    %v608 = vunpack.c.h.b16 %v215
    %v609 = vunpack.c.l.b16 %v216
    %v610 = vunpack.c.h.b16 %v216
    %v611 = vunpack.c.l.b16 %v217
    %v612 = vunpack.c.h.b16 %v217
    %v613 = vunpack.c.l.b16 %v218
    %v614 = vunpack.c.h.b16 %v218
    %v615 = vunpack.c.l.b16 %v219
    %v616 = vunpack.c.h.b16 %v219
    %v617 = vunpack.c.l.b16 %v220
    %v618 = vunpack.c.h.b16 %v220
    %v619 = vunpack.c.l.b16 %v221
    %v620 = vunpack.c.h.b16 %v221
    %v621 = vunpack.c.l.b16 %v222
    %v622 = vunpack.c.h.b16 %v222
    %v623 = vunpack.c.l.b16 %v223
    %v624 = vunpack.c.h.b16 %v223
    %v625 = vunpack.c.l.b16 %v224
    %v626 = vunpack.c.h.b16 %v224
    %v627 = vunpack.c.l.b16 %v225
    %v628 = vunpack.c.h.b16 %v225
    %v629 = vunpack.c.l.b16 %v226
    %v630 = vunpack.c.h.b16 %v226
    %v631 = vunpack.c.l.b16 %v227
    %v632 = vunpack.c.h.b16 %v227
    %v633 = vunpack.c.l.b16 %v228
    %v634 = vunpack.c.h.b16 %v228
    %v635 = vunpack.c.l.b16 %v229
    %v636 = vunpack.c.h.b16 %v229
    %v637 = vunpack.c.l.b16 %v230
    %v638 = vunpack.c.h.b16 %v230
    %v639 = vunpack.c.l.b16 %v231
    %v640 = vunpack.c.h.b16 %v231
    %v641 = vunpack.c.l.b16 %v232
    %v642 = vunpack.c.h.b16 %v232
    %v643 = vunpack.c.l.b16 %v233
    %v644 = vunpack.c.h.b16 %v233
    %v645 = vunpack.c.l.b16 %v234
    %v646 = vunpack.c.h.b16 %v234
    %v647 = vunpack.c.l.b16 %v235
    %v648 = vunpack.c.h.b16 %v235
    %v649 = vunpack.c.l.b16 %v236
    %v650 = vunpack.c.h.b16 %v236
    %v651 = vunpack.c.l.b16 %v237
    %v652 = vunpack.c.h.b16 %v237
    %v653 = vunpack.c.l.b16 %v238
    %v654 = vunpack.c.h.b16 %v238
    %v655 = vunpack.c.l.b16 %v239
    %v656 = vunpack.c.h.b16 %v239
    %v657 = vunpack.c.l.b16 %v240
    %v658 = vunpack.c.h.b16 %v240
    %v659 = vunpack.c.l.b16 %v241
    %v660 = vunpack.c.h.b16 %v241
    %v661 = vunpack.c.l.b16 %v242
    %v662 = vunpack.c.h.b16 %v242
    %v663 = vunpack.c.l.b16 %v243
    %v664 = vunpack.c.h.b16 %v243
    %v665 = vunpack.c.l.b16 %v244
    %v666 = vunpack.c.h.b16 %v244
    %v667 = vunpack.c.l.b16 %v245
    %v668 = vunpack.c.h.b16 %v245
    %v669 = vunpack.c.l.b16 %v246
    %v670 = vunpack.c.h.b16 %v246
    %v671 = vpack.c.b16 %v417, %v415
    %v672 = vpack.c.b16 %v418, %v416
    %v673 = vpack.c.b16 %v421, %v419
    %v674 = vpack.c.b16 %v422, %v420
    %v675 = vpack.c.b16 %v425, %v423
    %v676 = vpack.c.b16 %v426, %v424
    %v677 = vpack.c.b16 %v429, %v427
    %v678 = vpack.c.b16 %v430, %v428
    %v679 = vpack.c.b16 %v433, %v431
    %v680 = vpack.c.b16 %v434, %v432
    %v681 = vpack.c.b16 %v437, %v435
    %v682 = vpack.c.b16 %v438, %v436
    %v683 = vpack.c.b16 %v441, %v439
    %v684 = vpack.c.b16 %v442, %v440
    %v685 = vpack.c.b16 %v445, %v443
    %v686 = vpack.c.b16 %v446, %v444
    %v687 = vpack.c.b16 %v449, %v447
    %v688 = vpack.c.b16 %v450, %v448
    %v689 = vpack.c.b16 %v453, %v451
    %v690 = vpack.c.b16 %v454, %v452
    %v691 = vpack.c.b16 %v457, %v455
    %v692 = vpack.c.b16 %v458, %v456
    %v693 = vpack.c.b16 %v461, %v459
    %v694 = vpack.c.b16 %v462, %v460
    %v695 = vpack.c.b16 %v465, %v463
    %v696 = vpack.c.b16 %v466, %v464
    %v697 = vpack.c.b16 %v469, %v467
    %v698 = vpack.c.b16 %v470, %v468
    %v699 = vpack.c.b16 %v473, %v471
    %v700 = vpack.c.b16 %v474, %v472
    %v701 = vpack.c.b16 %v477, %v475
    %v702 = vpack.c.b16 %v478, %v476
    %v703 = vpack.c.b16 %v481, %v479
    %v704 = vpack.c.b16 %v482, %v480
    %v705 = vpack.c.b16 %v485, %v483
    %v706 = vpack.c.b16 %v486, %v484
    %v707 = vpack.c.b16 %v489, %v487
    %v708 = vpack.c.b16 %v490, %v488
    %v709 = vpack.c.b16 %v493, %v491
    %v710 = vpack.c.b16 %v494, %v492
    %v711 = vpack.c.b16 %v497, %v495
    %v712 = vpack.c.b16 %v498, %v496
    %v713 = vpack.c.b16 %v501, %v499
    %v714 = vpack.c.b16 %v502, %v500
    %v715 = vpack.c.b16 %v505, %v503
    %v716 = vpack.c.b16 %v506, %v504
    %v717 = vpack.c.b16 %v509, %v507
    %v718 = vpack.c.b16 %v510, %v508
    %v719 = vpack.c.b16 %v513, %v511
    %v720 = vpack.c.b16 %v514, %v512
    %v721 = vpack.c.b16 %v517, %v515
    %v722 = vpack.c.b16 %v518, %v516
    %v723 = vpack.c.b16 %v521, %v519
    %v724 = vpack.c.b16 %v522, %v520
    %v725 = vpack.c.b16 %v525, %v523
    %v726 = vpack.c.b16 %v526, %v524
    %v727 = vpack.c.b16 %v529, %v527
    %v728 = vpack.c.b16 %v530, %v528
    %v729 = vpack.c.b16 %v533, %v531
    %v730 = vpack.c.b16 %v534, %v532
    %v731 = vpack.c.b16 %v537, %v535
    %v732 = vpack.c.b16 %v538, %v536
    %v733 = vpack.c.b16 %v541, %v539
    %v734 = vpack.c.b16 %v542, %v540
    %v735 = vpack.c.b16 %v545, %v543
    %v736 = vpack.c.b16 %v546, %v544
    %v737 = vpack.c.b16 %v549, %v547
    %v738 = vpack.c.b16 %v550, %v548
    %v739 = vpack.c.b16 %v553, %v551
    %v740 = vpack.c.b16 %v554, %v552
    %v741 = vpack.c.b16 %v557, %v555
    %v742 = vpack.c.b16 %v558, %v556
    %v743 = vpack.c.b16 %v561, %v559
    %v744 = vpack.c.b16 %v562, %v560
    %v745 = vpack.c.b16 %v565, %v563
    %v746 = vpack.c.b16 %v566, %v564
    %v747 = vpack.c.b16 %v569, %v567
    %v748 = vpack.c.b16 %v570, %v568
    %v749 = vpack.c.b16 %v573, %v571
    %v750 = vpack.c.b16 %v574, %v572
    %v751 = vpack.c.b16 %v577, %v575
    %v752 = vpack.c.b16 %v578, %v576
    %v753 = vpack.c.b16 %v581, %v579
    %v754 = vpack.c.b16 %v582, %v580
    %v755 = vpack.c.b16 %v585, %v583
    %v756 = vpack.c.b16 %v586, %v584
    %v757 = vpack.c.b16 %v589, %v587
    %v758 = vpack.c.b16 %v590, %v588
    %v759 = vpack.c.b16 %v593, %v591
    %v760 = vpack.c.b16 %v594, %v592
    %v761 = vpack.c.b16 %v597, %v595
    %v762 = vpack.c.b16 %v598, %v596
    %v763 = vpack.c.b16 %v601, %v599
    %v764 = vpack.c.b16 %v602, %v600
    %v765 = vpack.c.b16 %v605, %v603
    %v766 = vpack.c.b16 %v606, %v604
    %v767 = vpack.c.b16 %v609, %v607
    %v768 = vpack.c.b16 %v610, %v608
    %v769 = vpack.c.b16 %v613, %v611
    %v770 = vpack.c.b16 %v614, %v612
    %v771 = vpack.c.b16 %v617, %v615
    %v772 = vpack.c.b16 %v618, %v616
    %v773 = vpack.c.b16 %v621, %v619
    %v774 = vpack.c.b16 %v622, %v620
    %v775 = vpack.c.b16 %v625, %v623
    %v776 = vpack.c.b16 %v626, %v624
    %v777 = vpack.c.b16 %v629, %v627
    %v778 = vpack.c.b16 %v630, %v628
    %v779 = vpack.c.b16 %v633, %v631
    %v780 = vpack.c.b16 %v634, %v632
    %v781 = vpack.c.b16 %v637, %v635
    %v782 = vpack.c.b16 %v638, %v636
    %v783 = vpack.c.b16 %v641, %v639
    %v784 = vpack.c.b16 %v642, %v640
    %v785 = vpack.c.b16 %v645, %v643
    %v786 = vpack.c.b16 %v646, %v644
    %v787 = vpack.c.b16 %v649, %v647
    %v788 = vpack.c.b16 %v650, %v648
    %v789 = vpack.c.b16 %v653, %v651
    %v790 = vpack.c.b16 %v654, %v652
    %v791 = vpack.c.b16 %v657, %v655
    %v792 = vpack.c.b16 %v658, %v656
    %v793 = vpack.c.b16 %v661, %v659
    %v794 = vpack.c.b16 %v662, %v660
    %v795 = vpack.c.b16 %v665, %v663
    %v796 = vpack.c.b16 %v666, %v664
    %v797 = vpack.c.b16 %v669, %v667
    %v798 = vpack.c.b16 %v670, %v668
    %927 = vmatprep.subr.bf16.mxu0 %v672
    %928 = vmatpush1.bf16.msra.mxu0 %v671
    %929 = vmatprep.subr.bf16.mxu0 %v674
    %930 = vmatpush1.bf16.msra.mxu0 %v673
    %931 = vmatprep.subr.bf16.mxu0 %v676
    %932 = vmatpush1.bf16.msra.mxu0 %v675
    %933 = vmatprep.subr.bf16.mxu0 %v678
    %934 = vmatpush1.bf16.msra.mxu0 %v677
    %935 = vmatprep.subr.bf16.mxu0 %v680
    %936 = vmatpush1.bf16.msra.mxu0 %v679
    %937 = vmatprep.subr.bf16.mxu0 %v682
    %938 = vmatpush1.bf16.msra.mxu0 %v681
    %939 = vmatprep.subr.bf16.mxu0 %v684
    %940 = vmatpush1.bf16.msra.mxu0 %v683
    %941 = vmatprep.subr.bf16.mxu0 %v686
    %942 = vmatpush1.bf16.msra.mxu0 %v685
    %943 = vmatprep.subr.bf16.mxu0 %v688
    %944 = vmatpush1.bf16.msra.mxu0 %v687
    %945 = vmatprep.subr.bf16.mxu0 %v690
    %946 = vmatpush1.bf16.msra.mxu0 %v689
    %947 = vmatprep.subr.bf16.mxu0 %v692
    %948 = vmatpush1.bf16.msra.mxu0 %v691
    %949 = vmatprep.subr.bf16.mxu0 %v694
    %950 = vmatpush1.bf16.msra.mxu0 %v693
    %951 = vmatprep.subr.bf16.mxu0 %v696
    %952 = vmatpush1.bf16.msra.mxu0 %v695
    %953 = vmatprep.subr.bf16.mxu0 %v698
    %954 = vmatpush1.bf16.msra.mxu0 %v697
    %955 = vmatprep.subr.bf16.mxu0 %v700
    %956 = vmatpush1.bf16.msra.mxu0 %v699
    %957 = vmatprep.subr.bf16.mxu0 %v702
    %958 = vmatpush1.bf16.msra.mxu0 %v701
    %959 = vmatprep.mubr.bf16.mxu0 %v272
    %960 = vmatmul.mubr.bf16.gmra.mrb[0].mxu0 %v271
    %v961 = vpop.f32.mrb[0].mxu0
    %v962 = vadd.f32 %v252, %v961
    %v963 = vpop.f32.mrb[0].mxu0
    %v964 = vadd.f32 %v256, %v963
    %v965 = vpop.f32.mrb[0].mxu0
    %v966 = vpop.f32.mrb[0].mxu0
    %967 = vdwg.mxu0
    %968 = vmatprep.subr.bf16.mxu0 %v704
    %969 = vmatpush1.bf16.msra.mxu0 %v703
    %970 = vmatprep.subr.bf16.mxu0 %v706
    %971 = vmatpush1.bf16.msra.mxu0 %v705
    %972 = vmatprep.subr.bf16.mxu0 %v708
    %973 = vmatpush1.bf16.msra.mxu0 %v707
    %974 = vmatprep.subr.bf16.mxu0 %v710
    %975 = vmatpush1.bf16.msra.mxu0 %v709
    %976 = vmatprep.subr.bf16.mxu0 %v712
    %977 = vmatpush1.bf16.msra.mxu0 %v711
    %978 = vmatprep.subr.bf16.mxu0 %v714
    %979 = vmatpush1.bf16.msra.mxu0 %v713
    %980 = vmatprep.subr.bf16.mxu0 %v716
    %981 = vmatpush1.bf16.msra.mxu0 %v715
    %982 = vmatprep.subr.bf16.mxu0 %v718
    %983 = vmatpush1.bf16.msra.mxu0 %v717
    %984 = vmatprep.subr.bf16.mxu0 %v720
    %985 = vmatpush1.bf16.msra.mxu0 %v719
    %986 = vmatprep.subr.bf16.mxu0 %v722
    %987 = vmatpush1.bf16.msra.mxu0 %v721
    %988 = vmatprep.subr.bf16.mxu0 %v724
    %989 = vmatpush1.bf16.msra.mxu0 %v723
    %990 = vmatprep.subr.bf16.mxu0 %v726
    %991 = vmatpush1.bf16.msra.mxu0 %v725
    %992 = vmatprep.subr.bf16.mxu0 %v728
    %993 = vmatpush1.bf16.msra.mxu0 %v727
    %994 = vmatprep.subr.bf16.mxu0 %v730
    %995 = vmatpush1.bf16.msra.mxu0 %v729
    %996 = vmatprep.subr.bf16.mxu0 %v732
    %997 = vmatpush1.bf16.msra.mxu0 %v731
    %998 = vmatprep.subr.bf16.mxu0 %v734
    %999 = vmatpush1.bf16.msra.mxu0 %v733
    %1000 = vmatprep.mubr.bf16.mxu0 %v274
    %1001 = vmatmul.mubr.bf16.gmra.mrb[0].mxu0 %v273
    %v1002 = vpop.f32.mrb[0].mxu0
    %v1003 = vadd.f32 %v962, %v1002
    %v1004 = vpop.f32.mrb[0].mxu0
    %v1005 = vadd.f32 %v964, %v1004
    %v1006 = vpop.f32.mrb[0].mxu0
    %v1007 = vpop.f32.mrb[0].mxu0
    %1008 = vdwg.mxu0
    %1009 = vmatprep.subr.bf16.mxu0 %v736
    %1010 = vmatpush1.bf16.msra.mxu0 %v735
    %1011 = vmatprep.subr.bf16.mxu0 %v738
    %1012 = vmatpush1.bf16.msra.mxu0 %v737
    %1013 = vmatprep.subr.bf16.mxu0 %v740
    %1014 = vmatpush1.bf16.msra.mxu0 %v739
    %1015 = vmatprep.subr.bf16.mxu0 %v742
    %1016 = vmatpush1.bf16.msra.mxu0 %v741
    %1017 = vmatprep.subr.bf16.mxu0 %v744
    %1018 = vmatpush1.bf16.msra.mxu0 %v743
    %1019 = vmatprep.subr.bf16.mxu0 %v746
    %1020 = vmatpush1.bf16.msra.mxu0 %v745
    %1021 = vmatprep.subr.bf16.mxu0 %v748
    %1022 = vmatpush1.bf16.msra.mxu0 %v747
    %1023 = vmatprep.subr.bf16.mxu0 %v750
    %1024 = vmatpush1.bf16.msra.mxu0 %v749
    %1025 = vmatprep.subr.bf16.mxu0 %v752
    %1026 = vmatpush1.bf16.msra.mxu0 %v751
    %1027 = vmatprep.subr.bf16.mxu0 %v754
    %1028 = vmatpush1.bf16.msra.mxu0 %v753
    %1029 = vmatprep.subr.bf16.mxu0 %v756
    %1030 = vmatpush1.bf16.msra.mxu0 %v755
    %1031 = vmatprep.subr.bf16.mxu0 %v758
    %1032 = vmatpush1.bf16.msra.mxu0 %v757
    %1033 = vmatprep.subr.bf16.mxu0 %v760
    %1034 = vmatpush1.bf16.msra.mxu0 %v759
    %1035 = vmatprep.subr.bf16.mxu0 %v762
    %1036 = vmatpush1.bf16.msra.mxu0 %v761
    %1037 = vmatprep.subr.bf16.mxu0 %v764
    %1038 = vmatpush1.bf16.msra.mxu0 %v763
    %1039 = vmatprep.subr.bf16.mxu0 %v766
    %1040 = vmatpush1.bf16.msra.mxu0 %v765
    %1041 = vmatprep.mubr.bf16.mxu0 %v276
    %1042 = vmatmul.mubr.bf16.gmra.mrb[0].mxu0 %v275
    %v1043 = vpop.f32.mrb[0].mxu0
    %v1044 = vadd.f32 %v1003, %v1043
    %v1045 = vpop.f32.mrb[0].mxu0
    %v1046 = vadd.f32 %v1005, %v1045
    %v1047 = vpop.f32.mrb[0].mxu0
    %v1048 = vpop.f32.mrb[0].mxu0
    %1049 = vdwg.mxu0
    %1050 = vmatprep.subr.bf16.mxu0 %v768
    %1051 = vmatpush1.bf16.msra.mxu0 %v767
    %1052 = vmatprep.subr.bf16.mxu0 %v770
    %1053 = vmatpush1.bf16.msra.mxu0 %v769
    %1054 = vmatprep.subr.bf16.mxu0 %v772
    %1055 = vmatpush1.bf16.msra.mxu0 %v771
    %1056 = vmatprep.subr.bf16.mxu0 %v774
    %1057 = vmatpush1.bf16.msra.mxu0 %v773
    %1058 = vmatprep.subr.bf16.mxu0 %v776
    %1059 = vmatpush1.bf16.msra.mxu0 %v775
    %1060 = vmatprep.subr.bf16.mxu0 %v778
    %1061 = vmatpush1.bf16.msra.mxu0 %v777
    %1062 = vmatprep.subr.bf16.mxu0 %v780
    %1063 = vmatpush1.bf16.msra.mxu0 %v779
    %1064 = vmatprep.subr.bf16.mxu0 %v782
    %1065 = vmatpush1.bf16.msra.mxu0 %v781
    %1066 = vmatprep.subr.bf16.mxu0 %v784
    %1067 = vmatpush1.bf16.msra.mxu0 %v783
    %1068 = vmatprep.subr.bf16.mxu0 %v786
    %1069 = vmatpush1.bf16.msra.mxu0 %v785
    %1070 = vmatprep.subr.bf16.mxu0 %v788
    %1071 = vmatpush1.bf16.msra.mxu0 %v787
    %1072 = vmatprep.subr.bf16.mxu0 %v790
    %1073 = vmatpush1.bf16.msra.mxu0 %v789
    %1074 = vmatprep.subr.bf16.mxu0 %v792
    %1075 = vmatpush1.bf16.msra.mxu0 %v791
    %1076 = vmatprep.subr.bf16.mxu0 %v794
    %1077 = vmatpush1.bf16.msra.mxu0 %v793
    %1078 = vmatprep.subr.bf16.mxu0 %v796
    %1079 = vmatpush1.bf16.msra.mxu0 %v795
    %1080 = vmatprep.subr.bf16.mxu0 %v798
    %1081 = vmatpush1.bf16.msra.mxu0 %v797
    %1082 = vmatprep.mubr.bf16.mxu0 %v278
    %1083 = vmatmul.mubr.bf16.gmra.mrb[0].mxu0 %v277
    %v1084 = vpop.f32.mrb[0].mxu0
    %v1085 = vadd.f32 %v1044, %v1084
    %v1086 = vpop.f32.mrb[0].mxu0
    %v1087 = vadd.f32 %v1046, %v1086
    %v1088 = vpop.f32.mrb[0].mxu0
    %v1089 = vpop.f32.mrb[0].mxu0
    %1090 = vdwg.mxu0
    %v1091 = vld [vmem:[#allocation7] sm:$0xf]
    %v1092 = vld [vmem:[#allocation7 + $0x4] sm:$0xf]
    %v1093 = vld [vmem:[#allocation7 + $0x8] sm:$0xf]
    %v1094 = vld [vmem:[#allocation7 + $0xc] sm:$0xf]
    %v1095 = vld [vmem:[#allocation7 + $0x10] sm:$0xf]
    %v1096 = vld [vmem:[#allocation7 + $0x14] sm:$0xf]
    %v1097 = vld [vmem:[#allocation7 + $0x18] sm:$0xf]
    %v1098 = vld [vmem:[#allocation7 + $0x1c] sm:$0xf]
    %v1099 = vld [vmem:[#allocation7 + $0x20] sm:$0xf]
    %v1100 = vld [vmem:[#allocation7 + $0x24] sm:$0xf]
    %v1101 = vld [vmem:[#allocation7 + $0x28] sm:$0xf]
    %v1102 = vld [vmem:[#allocation7 + $0x2c] sm:$0xf]
    %v1103 = vld [vmem:[#allocation7 + $0x30] sm:$0xf]
    %v1104 = vld [vmem:[#allocation7 + $0x34] sm:$0xf]
    %v1105 = vld [vmem:[#allocation7 + $0x38] sm:$0xf]
    %v1106 = vld [vmem:[#allocation7 + $0x3c] sm:$0xf]
    %v1107 = vld [vmem:[#allocation7 + $0x40] sm:$0xf]
    %v1108 = vld [vmem:[#allocation7 + $0x44] sm:$0xf]
    %v1109 = vld [vmem:[#allocation7 + $0x48] sm:$0xf]
    %v1110 = vld [vmem:[#allocation7 + $0x4c] sm:$0xf]
    %v1111 = vld [vmem:[#allocation7 + $0x50] sm:$0xf]
    %v1112 = vld [vmem:[#allocation7 + $0x54] sm:$0xf]
    %v1113 = vld [vmem:[#allocation7 + $0x58] sm:$0xf]
    %v1114 = vld [vmem:[#allocation7 + $0x5c] sm:$0xf]
    %v1115 = vld [vmem:[#allocation7 + $0x60] sm:$0xf]
    %v1116 = vld [vmem:[#allocation7 + $0x64] sm:$0xf]
    %v1117 = vld [vmem:[#allocation7 + $0x68] sm:$0xf]
    %v1118 = vld [vmem:[#allocation7 + $0x6c] sm:$0xf]
    %v1119 = vld [vmem:[#allocation7 + $0x70] sm:$0xf]
    %v1120 = vld [vmem:[#allocation7 + $0x74] sm:$0xf]
    %v1121 = vld [vmem:[#allocation7 + $0x78] sm:$0xf]
    %v1122 = vld [vmem:[#allocation7 + $0x7c] sm:$0xf]
    %v1123 = vld [vmem:[#allocation8] sm:$0xf]
    %v1124 = vld [vmem:[#allocation8 + $0x4] sm:$0xf]
    %v1125 = vld [vmem:[#allocation8 + $0x8] sm:$0xf]
    %v1126 = vld [vmem:[#allocation8 + $0xc] sm:$0xf]
    %v1127 = vld [vmem:[#allocation8 + $0x10] sm:$0xf]
    %v1128 = vld [vmem:[#allocation8 + $0x14] sm:$0xf]
    %v1129 = vld [vmem:[#allocation8 + $0x18] sm:$0xf]
    %v1130 = vld [vmem:[#allocation8 + $0x1c] sm:$0xf]
    %v1131 = vld [vmem:[#allocation8 + $0x20] sm:$0xf]
    %v1132 = vld [vmem:[#allocation8 + $0x24] sm:$0xf]
    %v1133 = vld [vmem:[#allocation8 + $0x28] sm:$0xf]
    %v1134 = vld [vmem:[#allocation8 + $0x2c] sm:$0xf]
    %v1135 = vld [vmem:[#allocation8 + $0x30] sm:$0xf]
    %v1136 = vld [vmem:[#allocation8 + $0x34] sm:$0xf]
    %v1137 = vld [vmem:[#allocation8 + $0x38] sm:$0xf]
    %v1138 = vld [vmem:[#allocation8 + $0x3c] sm:$0xf]
    %v1139 = vpack.c.bf16 %v1085, %v1085
    %v1140 = vpack.c.bf16 %v1087, %v1087
    %v1141 = vlaneseq
    %v1142 = vshrl.u32 %v1141, 7
    %v1143 = vsub.s32 0, %v1142
    %v1144 = vrot.slane %v114, %v1143
    %v1177 = vunpack.c.l.b16 %v1091
    %v1178 = vunpack.c.l.b16 %v1092
    %v1179 = vunpack.c.l.b16 %v1093
    %v1180 = vunpack.c.l.b16 %v1094
    %v1181 = vunpack.c.l.b16 %v1095
    %v1182 = vunpack.c.l.b16 %v1096
    %v1183 = vunpack.c.l.b16 %v1097
    %v1184 = vunpack.c.l.b16 %v1098
    %v1185 = vunpack.c.l.b16 %v1099
    %v1186 = vunpack.c.l.b16 %v1100
    %v1187 = vunpack.c.l.b16 %v1101
    %v1188 = vunpack.c.l.b16 %v1102
    %v1189 = vunpack.c.l.b16 %v1103
    %v1190 = vunpack.c.l.b16 %v1104
    %v1191 = vunpack.c.l.b16 %v1105
    %v1192 = vunpack.c.l.b16 %v1106
    %v1193 = vunpack.c.l.b16 %v1107
    %v1194 = vunpack.c.l.b16 %v1108
    %v1195 = vunpack.c.l.b16 %v1109
    %v1196 = vunpack.c.l.b16 %v1110
    %v1197 = vunpack.c.l.b16 %v1111
    %v1198 = vunpack.c.l.b16 %v1112
    %v1199 = vunpack.c.l.b16 %v1113
    %v1200 = vunpack.c.l.b16 %v1114
    %v1201 = vunpack.c.l.b16 %v1115
    %v1202 = vunpack.c.l.b16 %v1116
    %v1203 = vunpack.c.l.b16 %v1117
    %v1204 = vunpack.c.l.b16 %v1118
    %v1205 = vunpack.c.l.b16 %v1119
    %v1206 = vunpack.c.l.b16 %v1120
    %v1207 = vunpack.c.l.b16 %v1121
    %v1208 = vunpack.c.l.b16 %v1122
    %v1209 = vpack.c.b16 %v1178, %v1177
    %v1210 = vpack.c.b16 %v1180, %v1179
    %v1211 = vpack.c.b16 %v1182, %v1181
    %v1212 = vpack.c.b16 %v1184, %v1183
    %v1213 = vpack.c.b16 %v1186, %v1185
    %v1214 = vpack.c.b16 %v1188, %v1187
    %v1215 = vpack.c.b16 %v1190, %v1189
    %v1216 = vpack.c.b16 %v1192, %v1191
    %v1217 = vpack.c.b16 %v1194, %v1193
    %v1218 = vpack.c.b16 %v1196, %v1195
    %v1219 = vpack.c.b16 %v1198, %v1197
    %v1220 = vpack.c.b16 %v1200, %v1199
    %v1221 = vpack.c.b16 %v1202, %v1201
    %v1222 = vpack.c.b16 %v1204, %v1203
    %v1223 = vpack.c.b16 %v1206, %v1205
    %v1224 = vpack.c.b16 %v1208, %v1207
    %1241 = vmatprep.subr.bf16.mxu0 0
    %1242 = vmatpush1.bf16.msra.mxu0 %v1209
    %1243 = vmatprep.subr.bf16.mxu0 0
    %1244 = vmatpush1.bf16.msra.mxu0 %v1210
    %1245 = vmatprep.subr.bf16.mxu0 0
    %1246 = vmatpush1.bf16.msra.mxu0 %v1211
    %1247 = vmatprep.subr.bf16.mxu0 0
    %1248 = vmatpush1.bf16.msra.mxu0 %v1212
    %1249 = vmatprep.subr.bf16.mxu0 0
    %1250 = vmatpush1.bf16.msra.mxu0 %v1213
    %1251 = vmatprep.subr.bf16.mxu0 0
    %1252 = vmatpush1.bf16.msra.mxu0 %v1214
    %1253 = vmatprep.subr.bf16.mxu0 0
    %1254 = vmatpush1.bf16.msra.mxu0 %v1215
    %1255 = vmatprep.subr.bf16.mxu0 0
    %1256 = vmatpush1.bf16.msra.mxu0 %v1216
    %1257 = vmatprep.subr.bf16.mxu0 0
    %1258 = vmatpush1.bf16.msra.mxu0 %v1217
    %1259 = vmatprep.subr.bf16.mxu0 0
    %1260 = vmatpush1.bf16.msra.mxu0 %v1218
    %1261 = vmatprep.subr.bf16.mxu0 0
    %1262 = vmatpush1.bf16.msra.mxu0 %v1219
    %1263 = vmatprep.subr.bf16.mxu0 0
    %1264 = vmatpush1.bf16.msra.mxu0 %v1220
    %1265 = vmatprep.subr.bf16.mxu0 0
    %1266 = vmatpush1.bf16.msra.mxu0 %v1221
    %1267 = vmatprep.subr.bf16.mxu0 0
    %1268 = vmatpush1.bf16.msra.mxu0 %v1222
    %1269 = vmatprep.subr.bf16.mxu0 0
    %1270 = vmatpush1.bf16.msra.mxu0 %v1223
    %1271 = vmatprep.subr.bf16.mxu0 0
    %1272 = vmatpush1.bf16.msra.mxu0 %v1224
    %1273 = vmatprep.mubr.bf16.mxu0 %v1140
    %1274 = vmatmul.mubr.bf16.gmra.mrb[0].mxu0 %v1139
    %v1275 = vpop.f32.mrb[0].mxu0
    %v1276 = vadd.f32 %v1144, %v1275
    %v1277 = vpop.f32.mrb[0].mxu0
    %v1278 = vpop.f32.mrb[0].mxu0
    %v1279 = vpop.f32.mrb[0].mxu0
    %1280 = vdwg.mxu0
    %v1281 = vmul.f32 %v1276, %v1276
    %v1282 = vmul.f32 %v1276, %v1281
    %v1283 = vmul.f32 %v1282, 0.044715
    %v1284 = vadd.f32 %v1276, %v1283
    %v1285 = vmul.f32 %v1284, 0.7978846
    %v1286 = vtanh.pop %v1285
    %v1287 = vadd.f32 %v1286, 1.0
    %v1288 = vmul.f32 %v1287, 0.5
    %v1289 = vmul.f32 %v1276, %v1288
    %v1290 = vpack.c.bf16 %v1289, %v1289
    %v1291 = vlaneseq
    %v1292 = vshrl.u32 %v1291, 7
    %v1293 = vsub.s32 1, %v1292
    %v1294 = vrot.slane %v114, %v1293
    %v1311 = vunpack.c.l.b16 %v1123
    %v1312 = vunpack.c.l.b16 %v1124
    %v1313 = vunpack.c.l.b16 %v1125
    %v1314 = vunpack.c.l.b16 %v1126
    %v1315 = vunpack.c.l.b16 %v1127
    %v1316 = vunpack.c.l.b16 %v1128
    %v1317 = vunpack.c.l.b16 %v1129
    %v1318 = vunpack.c.l.b16 %v1130
    %v1319 = vunpack.c.l.b16 %v1131
    %v1320 = vunpack.c.l.b16 %v1132
    %v1321 = vunpack.c.l.b16 %v1133
    %v1322 = vunpack.c.l.b16 %v1134
    %v1323 = vunpack.c.l.b16 %v1135
    %v1324 = vunpack.c.l.b16 %v1136
    %v1325 = vunpack.c.l.b16 %v1137
    %v1326 = vunpack.c.l.b16 %v1138
    %v1327 = vpack.c.b16 %v1312, %v1311
    %v1328 = vpack.c.b16 %v1314, %v1313
    %v1329 = vpack.c.b16 %v1316, %v1315
    %v1330 = vpack.c.b16 %v1318, %v1317
    %v1331 = vpack.c.b16 %v1320, %v1319
    %v1332 = vpack.c.b16 %v1322, %v1321
    %v1333 = vpack.c.b16 %v1324, %v1323
    %v1334 = vpack.c.b16 %v1326, %v1325
    %1343 = vmatprep.subr.bf16.mxu0 0
    %1344 = vmatpush1.bf16.msra.mxu0 %v1327
    %1345 = vmatprep.subr.bf16.mxu0 0
    %1346 = vmatpush1.bf16.msra.mxu0 %v1328
    %1347 = vmatprep.subr.bf16.mxu0 0
    %1348 = vmatpush1.bf16.msra.mxu0 %v1329
    %1349 = vmatprep.subr.bf16.mxu0 0
    %1350 = vmatpush1.bf16.msra.mxu0 %v1330
    %1351 = vmatprep.subr.bf16.mxu0 0
    %1352 = vmatpush1.bf16.msra.mxu0 %v1331
    %1353 = vmatprep.subr.bf16.mxu0 0
    %1354 = vmatpush1.bf16.msra.mxu0 %v1332
    %1355 = vmatprep.subr.bf16.mxu0 0
    %1356 = vmatpush1.bf16.msra.mxu0 %v1333
    %1357 = vmatprep.subr.bf16.mxu0 0
    %1358 = vmatpush1.bf16.msra.mxu0 %v1334
    %1359 = vmatprep.subr.bf16.mxu0 0
    %1360 = vmatpush1.bf16.msra.mxu0 0
    %1361 = vmatprep.subr.bf16.mxu0 0
    %1362 = vmatpush1.bf16.msra.mxu0 0
    %1363 = vmatprep.subr.bf16.mxu0 0
    %1364 = vmatpush1.bf16.msra.mxu0 0
    %1365 = vmatprep.subr.bf16.mxu0 0
    %1366 = vmatpush1.bf16.msra.mxu0 0
    %1367 = vmatprep.subr.bf16.mxu0 0
    %1368 = vmatpush1.bf16.msra.mxu0 0
    %1369 = vmatprep.subr.bf16.mxu0 0
    %1370 = vmatpush1.bf16.msra.mxu0 0
    %1371 = vmatprep.subr.bf16.mxu0 0
    %1372 = vmatpush1.bf16.msra.mxu0 0
    %1373 = vmatprep.subr.bf16.mxu0 0
    %1374 = vmatpush1.bf16.msra.mxu0 0
    %1375 = vmatprep.mubr.bf16.mxu0 0
    %1376 = vmatmul.mubr.bf16.gmra.mrb[0].mxu0 %v1290
    %v1377 = vpop.f32.mrb[0].mxu0
    %v1378 = vadd.f32 %v1294, %v1377
    %v1379 = vpop.f32.mrb[0].mxu0
    %v1380 = vpop.f32.mrb[0].mxu0
    %v1381 = vpop.f32.mrb[0].mxu0
    %1382 = vdwg.mxu0
    %v1383 = vadd.f32 %v1378, %v1276
    %1384 = vadd.xlane.f32.xlu0 %v1383
    %v1385 = vpop.xlane.xlu0 %1384
    %v1386 = vrcp.pop 128.0
    %v1387 = vmul.f32 %v1385, %v1386
    %v1388 = vsub.f32 %v1383, %v1387
    %v1389 = vmul.f32 %v1388, %v1388
    %1390 = vadd.xlane.f32.xlu0 %v1389
    %v1391 = vpop.xlane.xlu0 %1390
    %v1392 = vmul.f32 %v1391, %v1386
    %v1393 = vadd.f32 %v1392, 1e-05
    %v1394 = vrsqrt.pop %v1393
    %v1395 = vmul.f32 %v1388, %v1394
    %v1396 = vlaneseq
    %v1397 = vshrl.u32 %v1396, 7
    %v1398 = vsub.s32 2, %v1397
    %v1399 = vrot.slane %v114, %v1398
    %v1400 = vmul.f32 %v1395, %v1399
    %v1401 = vlaneseq
    %v1402 = vshrl.u32 %v1401, 7
    %v1403 = vsub.s32 3, %v1402
    %v1404 = vrot.slane %v114, %v1403
    %v1405 = vadd.f32 %v1400, %v1404
    %v1406 = vld [vmem:[%s3] sm:$0xf]
    %v1407 = vld [vmem:[#allocation10] sm:$0xf]
    %v1408 = vld [vmem:[#allocation10 + $0x4] sm:$0xf]
    %v1409 = vld [vmem:[#allocation10 + $0x8] sm:$0xf]
    %v1410 = vld [vmem:[#allocation10 + $0xc] sm:$0xf]
    %v1411 = vld [vmem:[#allocation10 + $0x10] sm:$0xf]
    %v1412 = vld [vmem:[#allocation10 + $0x14] sm:$0xf]
    %v1413 = vld [vmem:[#allocation10 + $0x18] sm:$0xf]
    %v1414 = vld [vmem:[#allocation10 + $0x1c] sm:$0xf]
    %v1415 = vld [vmem:[#allocation10 + $0x20] sm:$0xf]
    %v1416 = vld [vmem:[#allocation10 + $0x24] sm:$0xf]
    %v1417 = vld [vmem:[#allocation10 + $0x28] sm:$0xf]
    %v1418 = vld [vmem:[#allocation10 + $0x2c] sm:$0xf]
    %v1419 = vld [vmem:[#allocation10 + $0x30] sm:$0xf]
    %v1420 = vld [vmem:[#allocation10 + $0x34] sm:$0xf]
    %v1421 = vld [vmem:[#allocation10 + $0x38] sm:$0xf]
    %v1422 = vld [vmem:[#allocation10 + $0x3c] sm:$0xf]
    %v1423 = vld [vmem:[#allocation11] sm:$0xf]
    %v1424 = vld [vmem:[#allocation11 + $0x4] sm:$0xf]
    %v1425 = vld [vmem:[#allocation11 + $0x8] sm:$0xf]
    %v1426 = vld [vmem:[#allocation11 + $0xc] sm:$0xf]
    %v1427 = vld [vmem:[#allocation11 + $0x10] sm:$0xf]
    %v1428 = vld [vmem:[#allocation11 + $0x14] sm:$0xf]
    %v1429 = vld [vmem:[#allocation11 + $0x18] sm:$0xf]
    %v1430 = vld [vmem:[#allocation11 + $0x1c] sm:$0xf]
    %v1431 = vld [vmem:[#allocation11 + $0x20] sm:$0xf]
    %v1432 = vld [vmem:[#allocation11 + $0x24] sm:$0xf]
    %v1433 = vld [vmem:[#allocation11 + $0x28] sm:$0xf]
    %v1434 = vld [vmem:[#allocation11 + $0x2c] sm:$0xf]
    %v1435 = vld [vmem:[#allocation11 + $0x30] sm:$0xf]
    %v1436 = vld [vmem:[#allocation11 + $0x34] sm:$0xf]
    %v1437 = vld [vmem:[#allocation11 + $0x38] sm:$0xf]
    %v1438 = vld [vmem:[#allocation11 + $0x3c] sm:$0xf]
    %v1439 = vlaneseq
    %v1440 = vshrl.u32 %v1439, 7
    %v1441 = vsub.s32 4, %v1440
    %v1442 = vrot.slane %v114, %v1441
    %v1459 = vunpack.c.l.b16 %v1407
    %v1460 = vunpack.c.l.b16 %v1408
    %v1461 = vunpack.c.l.b16 %v1409
    %v1462 = vunpack.c.l.b16 %v1410
    %v1463 = vunpack.c.l.b16 %v1411
    %v1464 = vunpack.c.l.b16 %v1412
    %v1465 = vunpack.c.l.b16 %v1413
    %v1466 = vunpack.c.l.b16 %v1414
    %v1467 = vunpack.c.l.b16 %v1415
    %v1468 = vunpack.c.l.b16 %v1416
    %v1469 = vunpack.c.l.b16 %v1417
    %v1470 = vunpack.c.l.b16 %v1418
    %v1471 = vunpack.c.l.b16 %v1419
    %v1472 = vunpack.c.l.b16 %v1420
    %v1473 = vunpack.c.l.b16 %v1421
    %v1474 = vunpack.c.l.b16 %v1422
    %v1475 = vpack.c.b16 %v1460, %v1459
    %v1476 = vpack.c.b16 %v1462, %v1461
    %v1477 = vpack.c.b16 %v1464, %v1463
    %v1478 = vpack.c.b16 %v1466, %v1465
    %v1479 = vpack.c.b16 %v1468, %v1467
    %v1480 = vpack.c.b16 %v1470, %v1469
    %v1481 = vpack.c.b16 %v1472, %v1471
    %v1482 = vpack.c.b16 %v1474, %v1473
    %1491 = vmatprep.subr.bf16.mxu0 0
    %1492 = vmatpush1.bf16.msra.mxu0 %v1475
    %1493 = vmatprep.subr.bf16.mxu0 0
    %1494 = vmatpush1.bf16.msra.mxu0 %v1476
    %1495 = vmatprep.subr.bf16.mxu0 0
    %1496 = vmatpush1.bf16.msra.mxu0 %v1477
    %1497 = vmatprep.subr.bf16.mxu0 0
    %1498 = vmatpush1.bf16.msra.mxu0 %v1478
    %1499 = vmatprep.subr.bf16.mxu0 0
    %1500 = vmatpush1.bf16.msra.mxu0 %v1479
    %1501 = vmatprep.subr.bf16.mxu0 0
    %1502 = vmatpush1.bf16.msra.mxu0 %v1480
    %1503 = vmatprep.subr.bf16.mxu0 0
    %1504 = vmatpush1.bf16.msra.mxu0 %v1481
    %1505 = vmatprep.subr.bf16.mxu0 0
    %1506 = vmatpush1.bf16.msra.mxu0 %v1482
    %1507 = vmatprep.subr.bf16.mxu0 0
    %1508 = vmatpush1.bf16.msra.mxu0 0
    %1509 = vmatprep.subr.bf16.mxu0 0
    %1510 = vmatpush1.bf16.msra.mxu0 0
    %1511 = vmatprep.subr.bf16.mxu0 0
    %1512 = vmatpush1.bf16.msra.mxu0 0
    %1513 = vmatprep.subr.bf16.mxu0 0
    %1514 = vmatpush1.bf16.msra.mxu0 0
    %1515 = vmatprep.subr.bf16.mxu0 0
    %1516 = vmatpush1.bf16.msra.mxu0 0
    %1517 = vmatprep.subr.bf16.mxu0 0
    %1518 = vmatpush1.bf16.msra.mxu0 0
    %1519 = vmatprep.subr.bf16.mxu0 0
    %1520 = vmatpush1.bf16.msra.mxu0 0
    %1521 = vmatprep.subr.bf16.mxu0 0
    %1522 = vmatpush1.bf16.msra.mxu0 0
    %1523 = vmatprep.mubr.bf16.mxu0 0
    %1524 = vmatmul.mubr.bf16.gmra.mrb[0].mxu0 %v1406
    %v1525 = vpop.f32.mrb[0].mxu0
    %v1526 = vadd.f32 %v1442, %v1525
    %v1527 = vpop.f32.mrb[0].mxu0
    %v1528 = vpop.f32.mrb[0].mxu0
    %v1529 = vpop.f32.mrb[0].mxu0
    %1530 = vdwg.mxu0
    %v1531 = vmul.f32 %v1526, %v1526
    %v1532 = vmul.f32 %v1526, %v1531
    %v1533 = vmul.f32 %v1532, 0.044715
    %v1534 = vadd.f32 %v1526, %v1533
    %v1535 = vmul.f32 %v1534, 0.7978846
    %v1536 = vtanh.pop %v1535
    %v1537 = vadd.f32 %v1536, 1.0
    %v1538 = vmul.f32 %v1537, 0.5
    %v1539 = vmul.f32 %v1526, %v1538
    %v1540 = vpack.c.bf16 %v1539, %v1539
    %v1541 = vlaneseq
    %v1542 = vshrl.u32 %v1541, 7
    %v1543 = vsub.s32 5, %v1542
    %v1544 = vrot.slane %v114, %v1543
    %v1561 = vunpack.c.l.b16 %v1423
    %v1562 = vunpack.c.l.b16 %v1424
    %v1563 = vunpack.c.l.b16 %v1425
    %v1564 = vunpack.c.l.b16 %v1426
    %v1565 = vunpack.c.l.b16 %v1427
    %v1566 = vunpack.c.l.b16 %v1428
    %v1567 = vunpack.c.l.b16 %v1429
    %v1568 = vunpack.c.l.b16 %v1430
    %v1569 = vunpack.c.l.b16 %v1431
    %v1570 = vunpack.c.l.b16 %v1432
    %v1571 = vunpack.c.l.b16 %v1433
    %v1572 = vunpack.c.l.b16 %v1434
    %v1573 = vunpack.c.l.b16 %v1435
    %v1574 = vunpack.c.l.b16 %v1436
    %v1575 = vunpack.c.l.b16 %v1437
    %v1576 = vunpack.c.l.b16 %v1438
    %v1577 = vpack.c.b16 %v1562, %v1561
    %v1578 = vpack.c.b16 %v1564, %v1563
    %v1579 = vpack.c.b16 %v1566, %v1565
    %v1580 = vpack.c.b16 %v1568, %v1567
    %v1581 = vpack.c.b16 %v1570, %v1569
    %v1582 = vpack.c.b16 %v1572, %v1571
    %v1583 = vpack.c.b16 %v1574, %v1573
    %v1584 = vpack.c.b16 %v1576, %v1575
    %1593 = vmatprep.subr.bf16.mxu0 0
    %1594 = vmatpush1.bf16.msra.mxu0 %v1577
    %1595 = vmatprep.subr.bf16.mxu0 0
    %1596 = vmatpush1.bf16.msra.mxu0 %v1578
    %1597 = vmatprep.subr.bf16.mxu0 0
    %1598 = vmatpush1.bf16.msra.mxu0 %v1579
    %1599 = vmatprep.subr.bf16.mxu0 0
    %1600 = vmatpush1.bf16.msra.mxu0 %v1580
    %1601 = vmatprep.subr.bf16.mxu0 0
    %1602 = vmatpush1.bf16.msra.mxu0 %v1581
    %1603 = vmatprep.subr.bf16.mxu0 0
    %1604 = vmatpush1.bf16.msra.mxu0 %v1582
    %1605 = vmatprep.subr.bf16.mxu0 0
    %1606 = vmatpush1.bf16.msra.mxu0 %v1583
    %1607 = vmatprep.subr.bf16.mxu0 0
    %1608 = vmatpush1.bf16.msra.mxu0 %v1584
    %1609 = vmatprep.subr.bf16.mxu0 0
    %1610 = vmatpush1.bf16.msra.mxu0 0
    %1611 = vmatprep.subr.bf16.mxu0 0
    %1612 = vmatpush1.bf16.msra.mxu0 0
    %1613 = vmatprep.subr.bf16.mxu0 0
    %1614 = vmatpush1.bf16.msra.mxu0 0
    %1615 = vmatprep.subr.bf16.mxu0 0
    %1616 = vmatpush1.bf16.msra.mxu0 0
    %1617 = vmatprep.subr.bf16.mxu0 0
    %1618 = vmatpush1.bf16.msra.mxu0 0
    %1619 = vmatprep.subr.bf16.mxu0 0
    %1620 = vmatpush1.bf16.msra.mxu0 0
    %1621 = vmatprep.subr.bf16.mxu0 0
    %1622 = vmatpush1.bf16.msra.mxu0 0
    %1623 = vmatprep.subr.bf16.mxu0 0
    %1624 = vmatpush1.bf16.msra.mxu0 0
    %1625 = vmatprep.mubr.bf16.mxu0 0
    %1626 = vmatmul.mubr.bf16.gmra.mrb[0].mxu0 %v1540
    %v1627 = vpop.f32.mrb[0].mxu0
    %v1628 = vadd.f32 %v1544, %v1627
    %v1629 = vpop.f32.mrb[0].mxu0
    %v1630 = vpop.f32.mrb[0].mxu0
    %v1631 = vpop.f32.mrb[0].mxu0
    %1632 = vdwg.mxu0
    %v1633 = vadd.f32 %v1628, %v1526
    %1634 = vadd.xlane.f32.xlu0 %v1633
    %v1635 = vpop.xlane.xlu0 %1634
    %v1636 = vmul.f32 %v1635, %v1386
    %v1637 = vsub.f32 %v1633, %v1636
    %v1638 = vmul.f32 %v1637, %v1637
    %1639 = vadd.xlane.f32.xlu0 %v1638
    %v1640 = vpop.xlane.xlu0 %1639
    %v1641 = vmul.f32 %v1640, %v1386
    %v1642 = vadd.f32 %v1641, 1e-05
    %v1643 = vrsqrt.pop %v1642
    %v1644 = vmul.f32 %v1637, %v1643
    %v1645 = vlaneseq
    %v1646 = vshrl.u32 %v1645, 7
    %v1647 = vsub.s32 6, %v1646
    %v1648 = vrot.slane %v114, %v1647
    %v1649 = vmul.f32 %v1644, %v1648
    %v1650 = vlaneseq
    %v1651 = vshrl.u32 %v1650, 7
    %v1652 = vsub.s32 7, %v1651
    %v1653 = vrot.slane %v114, %v1652
    %v1654 = vadd.f32 %v1649, %v1653
    %v1655 = vpack.c.bf16 %v1405, %v1405
    %v1656 = vpack.c.bf16 %v1654, %v1654
    %1657 = vmatprep.subr.bf16.mxu0 0
    %1658 = vmatpush1.bf16.xpose.msra.mxu0 %v1655
    %1659 = vmatprep.subr.bf16.mxu0 0
    %1660 = vmatpush1.bf16.xpose.msra.mxu0 0
    %1661 = vmatprep.subr.bf16.mxu0 0
    %1662 = vmatpush1.bf16.xpose.msra.mxu0 0
    %1663 = vmatprep.subr.bf16.mxu0 0
    %1664 = vmatpush1.bf16.xpose.msra.mxu0 0
    %1665 = vmatprep.subr.bf16.mxu0 0
    %1666 = vmatpush1.bf16.xpose.msra.mxu0 0
    %1667 = vmatprep.subr.bf16.mxu0 0
    %1668 = vmatpush1.bf16.xpose.msra.mxu0 0
    %1669 = vmatprep.subr.bf16.mxu0 0
    %1670 = vmatpush1.bf16.xpose.msra.mxu0 0
    %1671 = vmatprep.subr.bf16.mxu0 0
    %1672 = vmatpush1.bf16.xpose.msra.mxu0 0
    %1673 = vmatprep.subr.bf16.mxu0 0
    %1674 = vmatpush1.bf16.xpose.msra.mxu0 0
    %1675 = vmatprep.subr.bf16.mxu0 0
    %1676 = vmatpush1.bf16.xpose.msra.mxu0 0
    %1677 = vmatprep.subr.bf16.mxu0 0
    %1678 = vmatpush1.bf16.xpose.msra.mxu0 0
    %1679 = vmatprep.subr.bf16.mxu0 0
    %1680 = vmatpush1.bf16.xpose.msra.mxu0 0
    %1681 = vmatprep.subr.bf16.mxu0 0
    %1682 = vmatpush1.bf16.xpose.msra.mxu0 0
    %1683 = vmatprep.subr.bf16.mxu0 0
    %1684 = vmatpush1.bf16.xpose.msra.mxu0 0
    %1685 = vmatprep.subr.bf16.mxu0 0
    %1686 = vmatpush1.bf16.xpose.msra.mxu0 0
    %1687 = vmatprep.subr.bf16.mxu0 0
    %1688 = vmatpush1.bf16.xpose.msra.mxu0 0
    %1689 = vmatprep.mubr.bf16.mxu0 0
    %1690 = vmatmul.mubr.bf16.gmra.mrb[0].mxu0 %v1656
    %v1691 = vpop.f32.mrb[0].mxu0
    %v1692 = vadd.f32 0.0, %v1691
    %v1693 = vpop.f32.mrb[0].mxu0
    %v1694 = vpop.f32.mrb[0].mxu0
    %v1695 = vpop.f32.mrb[0].mxu0
    %1696 = vdwg.mxu0
    %1697 = vmatprep.subr.bf16.mxu0 0
    %1698 = vmatpush1.bf16.xpose.msra.mxu0 %v1656
    %1699 = vmatprep.subr.bf16.mxu0 0
    %1700 = vmatpush1.bf16.xpose.msra.mxu0 0
    %1701 = vmatprep.subr.bf16.mxu0 0
    %1702 = vmatpush1.bf16.xpose.msra.mxu0 0
    %1703 = vmatprep.subr.bf16.mxu0 0
    %1704 = vmatpush1.bf16.xpose.msra.mxu0 0
    %1705 = vmatprep.subr.bf16.mxu0 0
    %1706 = vmatpush1.bf16.xpose.msra.mxu0 0
    %1707 = vmatprep.subr.bf16.mxu0 0
    %1708 = vmatpush1.bf16.xpose.msra.mxu0 0
    %1709 = vmatprep.subr.bf16.mxu0 0
    %1710 = vmatpush1.bf16.xpose.msra.mxu0 0
    %1711 = vmatprep.subr.bf16.mxu0 0
    %1712 = vmatpush1.bf16.xpose.msra.mxu0 0
    %1713 = vmatprep.subr.bf16.mxu0 0
    %1714 = vmatpush1.bf16.xpose.msra.mxu0 0
    %1715 = vmatprep.subr.bf16.mxu0 0
    %1716 = vmatpush1.bf16.xpose.msra.mxu0 0
    %1717 = vmatprep.subr.bf16.mxu0 0
    %1718 = vmatpush1.bf16.xpose.msra.mxu0 0
    %1719 = vmatprep.subr.bf16.mxu0 0
    %1720 = vmatpush1.bf16.xpose.msra.mxu0 0
    %1721 = vmatprep.subr.bf16.mxu0 0
    %1722 = vmatpush1.bf16.xpose.msra.mxu0 0
    %1723 = vmatprep.subr.bf16.mxu0 0
    %1724 = vmatpush1.bf16.xpose.msra.mxu0 0
    %1725 = vmatprep.subr.bf16.mxu0 0
    %1726 = vmatpush1.bf16.xpose.msra.mxu0 0
    %1727 = vmatprep.subr.bf16.mxu0 0
    %1728 = vmatpush1.bf16.xpose.msra.mxu0 0
    %1729 = vmatprep.mubr.bf16.mxu0 0
    %1730 = vmatmul.mubr.bf16.gmra.mrb[0].mxu0 %v1655
    %v1731 = vpop.f32.mrb[0].mxu0
    %v1732 = vadd.f32 0.0, %v1731
    %v1733 = vpop.f32.mrb[0].mxu0
    %v1734 = vpop.f32.mrb[0].mxu0
    %v1735 = vpop.f32.mrb[0].mxu0
    %1736 = vdwg.mxu0
    %1737 = vmatprep.subr.bf16.mxu0 0
    %1738 = vmatpush1.bf16.xpose.msra.mxu0 %v1656
    %1739 = vmatprep.subr.bf16.mxu0 0
    %1740 = vmatpush1.bf16.xpose.msra.mxu0 0
    %1741 = vmatprep.subr.bf16.mxu0 0
    %1742 = vmatpush1.bf16.xpose.msra.mxu0 0
    %1743 = vmatprep.subr.bf16.mxu0 0
    %1744 = vmatpush1.bf16.xpose.msra.mxu0 0
    %1745 = vmatprep.subr.bf16.mxu0 0
    %1746 = vmatpush1.bf16.xpose.msra.mxu0 0
    %1747 = vmatprep.subr.bf16.mxu0 0
    %1748 = vmatpush1.bf16.xpose.msra.mxu0 0
    %1749 = vmatprep.subr.bf16.mxu0 0
    %1750 = vmatpush1.bf16.xpose.msra.mxu0 0
    %1751 = vmatprep.subr.bf16.mxu0 0
    %1752 = vmatpush1.bf16.xpose.msra.mxu0 0
    %1753 = vmatprep.subr.bf16.mxu0 0
    %1754 = vmatpush1.bf16.xpose.msra.mxu0 0
    %1755 = vmatprep.subr.bf16.mxu0 0
    %1756 = vmatpush1.bf16.xpose.msra.mxu0 0
    %1757 = vmatprep.subr.bf16.mxu0 0
    %1758 = vmatpush1.bf16.xpose.msra.mxu0 0
    %1759 = vmatprep.subr.bf16.mxu0 0
    %1760 = vmatpush1.bf16.xpose.msra.mxu0 0
    %1761 = vmatprep.subr.bf16.mxu0 0
    %1762 = vmatpush1.bf16.xpose.msra.mxu0 0
    %1763 = vmatprep.subr.bf16.mxu0 0
    %1764 = vmatpush1.bf16.xpose.msra.mxu0 0
    %1765 = vmatprep.subr.bf16.mxu0 0
    %1766 = vmatpush1.bf16.xpose.msra.mxu0 0
    %1767 = vmatprep.subr.bf16.mxu0 0
    %1768 = vmatpush1.bf16.xpose.msra.mxu0 0
    %1769 = vmatprep.mubr.bf16.mxu0 0
    %1770 = vmatmul.mubr.bf16.gmra.mrb[0].mxu0 %v1656
    %v1771 = vpop.f32.mrb[0].mxu0
    %v1772 = vadd.f32 0.0, %v1771
    %v1773 = vpop.f32.mrb[0].mxu0
    %v1774 = vpop.f32.mrb[0].mxu0
    %v1775 = vpop.f32.mrb[0].mxu0
    %1776 = vdwg.mxu0
    %1777 = vmatprep.subr.bf16.mxu0 0
    %1778 = vmatpush1.bf16.xpose.msra.mxu0 %v1655
    %1779 = vmatprep.subr.bf16.mxu0 0
    %1780 = vmatpush1.bf16.xpose.msra.mxu0 0
    %1781 = vmatprep.subr.bf16.mxu0 0
    %1782 = vmatpush1.bf16.xpose.msra.mxu0 0
    %1783 = vmatprep.subr.bf16.mxu0 0
    %1784 = vmatpush1.bf16.xpose.msra.mxu0 0
    %1785 = vmatprep.subr.bf16.mxu0 0
    %1786 = vmatpush1.bf16.xpose.msra.mxu0 0
    %1787 = vmatprep.subr.bf16.mxu0 0
    %1788 = vmatpush1.bf16.xpose.msra.mxu0 0
    %1789 = vmatprep.subr.bf16.mxu0 0
    %1790 = vmatpush1.bf16.xpose.msra.mxu0 0
    %1791 = vmatprep.subr.bf16.mxu0 0
    %1792 = vmatpush1.bf16.xpose.msra.mxu0 0
    %1793 = vmatprep.subr.bf16.mxu0 0
    %1794 = vmatpush1.bf16.xpose.msra.mxu0 0
    %1795 = vmatprep.subr.bf16.mxu0 0
    %1796 = vmatpush1.bf16.xpose.msra.mxu0 0
    %1797 = vmatprep.subr.bf16.mxu0 0
    %1798 = vmatpush1.bf16.xpose.msra.mxu0 0
    %1799 = vmatprep.subr.bf16.mxu0 0
    %1800 = vmatpush1.bf16.xpose.msra.mxu0 0
    %1801 = vmatprep.subr.bf16.mxu0 0
    %1802 = vmatpush1.bf16.xpose.msra.mxu0 0
    %1803 = vmatprep.subr.bf16.mxu0 0
    %1804 = vmatpush1.bf16.xpose.msra.mxu0 0
    %1805 = vmatprep.subr.bf16.mxu0 0
    %1806 = vmatpush1.bf16.xpose.msra.mxu0 0
    %1807 = vmatprep.subr.bf16.mxu0 0
    %1808 = vmatpush1.bf16.xpose.msra.mxu0 0
    %1809 = vmatprep.mubr.bf16.mxu0 0
    %1810 = vmatmul.mubr.bf16.gmra.mrb[0].mxu0 %v1655
    %v1811 = vpop.f32.mrb[0].mxu0
    %v1812 = vadd.f32 %v1772, %v1811
    %v1813 = vpop.f32.mrb[0].mxu0
    %v1814 = vpop.f32.mrb[0].mxu0
    %v1815 = vpop.f32.mrb[0].mxu0
    %1816 = vdwg.mxu0
    %v1817 = vmul.f32 %v1812, 0.5
    %vm1818 = vcmask 64512
    %v1819 = vsel %vm1818, %v1817, -inf
    %1820 = vmax.xlane.f32.xlu0 %v1819
    %v1821 = vpop.xlane.xlu0 %1820
    %v1822 = vsub.f32 %v1817, %v1821
    %v1823 = vmul.f32 %v1822, 1.442695
    %v1824 = vpow.pop %v1823
    %v1825 = vsel %vm1818, %v1824, 0.0
    %1826 = vadd.xlane.f32.xlu0 %v1825
    %v1827 = vpop.xlane.xlu0 %1826
    %v1828 = vrcp.pop %v1827
    %v1829 = vmul.f32 %v1824, %v1828
    %v1830 = vsel %vm1818, %v1692, -inf
    %1831 = vmax.xlane.f32.xlu0 %v1830
    %v1832 = vpop.xlane.xlu0 %1831
    %v1833 = vsub.f32 %v1692, %v1832
    %v1834 = vmul.f32 %v1833, 1.442695
    %v1835 = vpow.pop %v1834
    %v1836 = vsel %vm1818, %v1835, 0.0
    %1837 = vadd.xlane.f32.xlu0 %v1836
    %v1838 = vpop.xlane.xlu0 %1837
    %v1839 = vlog2.pop %v1838
    %v1840 = vmul.f32 %v1839, 0.6931472
    %v1841 = vsub.f32 %v1833, %v1840
    %v1842 = vsel %vm1818, %v1732, -inf
    %1843 = vmax.xlane.f32.xlu0 %v1842
    %v1844 = vpop.xlane.xlu0 %1843
    %v1845 = vsub.f32 %v1732, %v1844
    %v1846 = vmul.f32 %v1845, 1.442695
    %v1847 = vpow.pop %v1846
    %v1848 = vsel %vm1818, %v1847, 0.0
    %1849 = vadd.xlane.f32.xlu0 %v1848
    %v1850 = vpop.xlane.xlu0 %1849
    %v1851 = vlog2.pop %v1850
    %v1852 = vmul.f32 %v1851, 0.6931472
    %v1853 = vsub.f32 %v1845, %v1852
    %v1854 = vmul.f32 %v1829, %v1841
    %v1855 = vsel %vm1818, %v1854, 0.0
    %1856 = vadd.xlane.f32.xlu0 %v1855
    %v1857 = vpop.xlane.xlu0 %1856
    %v1858 = vrot.slane %v1857, 4
    %v1859 = vadd.f32 %v1857, %v1858
    %v1860 = vrot.slane %v1859, 2
    %v1861 = vadd.f32 %v1859, %v1860
    %v1862 = vrot.slane %v1861, 1
    %v1863 = vadd.f32 %v1861, %v1862
    %s1864 = vtos %v1863
    %v1866 = vsel %vm1818, %v1829, 0
    %1868 = vmatprep.subr.mxu0 0.0
    %1869 = vmatpush1.msra.mxu0 %v1853
    %1870 = vmatprep.subr.mxu0 0.0
    %1871 = vmatpush1.msra.mxu0 0.0
    %1872 = vmatprep.subr.mxu0 0.0
    %1873 = vmatpush1.msra.mxu0 0.0
    %1874 = vmatprep.subr.mxu0 0.0
    %1875 = vmatpush1.msra.mxu0 0.0
    %1876 = vmatprep.subr.mxu0 0.0
    %1877 = vmatpush1.msra.mxu0 0.0
    %1878 = vmatprep.subr.mxu0 0.0
    %1879 = vmatpush1.msra.mxu0 0.0
    %1880 = vmatprep.subr.mxu0 0.0
    %1881 = vmatpush1.msra.mxu0 0.0
    %1882 = vmatprep.subr.mxu0 0.0
    %1883 = vmatpush1.msra.mxu0 0.0
    %1884 = vmatprep.subr.mxu0 0.0
    %1885 = vmatpush1.msra.mxu0 0.0
    %1886 = vmatprep.subr.mxu0 0.0
    %1887 = vmatpush1.msra.mxu0 0.0
    %1888 = vmatprep.subr.mxu0 0.0
    %1889 = vmatpush1.msra.mxu0 0.0
    %1890 = vmatprep.subr.mxu0 0.0
    %1891 = vmatpush1.msra.mxu0 0.0
    %1892 = vmatprep.subr.mxu0 0.0
    %1893 = vmatpush1.msra.mxu0 0.0
    %1894 = vmatprep.subr.mxu0 0.0
    %1895 = vmatpush1.msra.mxu0 0.0
    %1896 = vmatprep.subr.mxu0 0.0
    %1897 = vmatpush1.msra.mxu0 0.0
    %1898 = vmatprep.subr.mxu0 0.0
    %1899 = vmatpush1.msra.mxu0 0.0
    %1900 = vmatprep.subr.mxu0 0.0
    %1901 = vmatpush1.msra.mxu0 0.0
    %1902 = vmatprep.subr.mxu0 0.0
    %1903 = vmatpush1.msra.mxu0 0.0
    %1904 = vmatprep.subr.mxu0 0.0
    %1905 = vmatpush1.msra.mxu0 0.0
    %1906 = vmatprep.subr.mxu0 0.0
    %1907 = vmatpush1.msra.mxu0 0.0
    %1908 = vmatprep.subr.mxu0 0.0
    %1909 = vmatpush1.msra.mxu0 0.0
    %1910 = vmatprep.subr.mxu0 0.0
    %1911 = vmatpush1.msra.mxu0 0.0
    %1912 = vmatprep.subr.mxu0 0.0
    %1913 = vmatpush1.msra.mxu0 0.0
    %1914 = vmatprep.subr.mxu0 0.0
    %1915 = vmatpush1.msra.mxu0 0.0
    %1916 = vmatprep.subr.mxu0 0.0
    %1917 = vmatpush1.msra.mxu0 0.0
    %1918 = vmatprep.subr.mxu0 0.0
    %1919 = vmatpush1.msra.mxu0 0.0
    %1920 = vmatprep.subr.mxu0 0.0
    %1921 = vmatpush1.msra.mxu0 0.0
    %1922 = vmatprep.subr.mxu0 0.0
    %1923 = vmatpush1.msra.mxu0 0.0
    %1924 = vmatprep.subr.mxu0 0.0
    %1925 = vmatpush1.msra.mxu0 0.0
    %1926 = vmatprep.subr.mxu0 0.0
    %1927 = vmatpush1.msra.mxu0 0.0
    %1928 = vmatprep.subr.mxu0 0.0
    %1929 = vmatpush1.msra.mxu0 0.0
    %1930 = vmatprep.subr.mxu0 0.0
    %1931 = vmatpush1.msra.mxu0 0.0
    %1932 = vmatprep.mubr.f32.mxu0 0.0
    %1933 = vmatmul.mubr.f32.gmra.mrb[0].mxu0 %v1866
    %v1934 = vpop.f32.mrb[0].mxu0
    %v1935 = vadd.f32 0.0, %v1934
    %v1936 = vpop.f32.mrb[0].mxu0
    %1937 = vdwg.mxu0
    %v1938 = vlaneseq
    %v1939 = vshrl.u32 %v1938, 7
    %v1940 = vlaneseq
    %v1941 = vand.u32 %v1940, 127
    %vm1942 = vcmp.eq.s32.totalorder %v1939, %v1941
    %v1943 = vsel %vm1942, %v1935, 0.0
    %v1944 = vsel %vm1818, %v1943, 0.0
    %1945 = vadd.xlane.f32.xlu0 %v1944
    %v1946 = vpop.xlane.xlu0 %1945
    %v1947 = vrot.slane %v1946, 4
    %v1948 = vadd.f32 %v1946, %v1947
    %v1949 = vrot.slane %v1948, 2
    %v1950 = vadd.f32 %v1948, %v1949
    %v1951 = vrot.slane %v1950, 1
    %v1952 = vadd.f32 %v1950, %v1951
    %s1953 = vtos %v1952
    %s1954 = sadd.f32 %s1864, %s1953
    %s1955 = ssub.f32 0.0, %s1954
    %s1956 = smul.f32 %s1955, 0.0625
    %s1957 = scalar_lea.smem [#allocation13], 0
    %1958 = sst [smem:[%s1957]] %s1956
    // Predicated region
    $region62: #{tpu_custom_call.1} parent=1 // pred_check
      _
    $region63: #{tpu_custom_call.1} parent=1 // pred_check_branch
      %1960 = sbr.rel (0) target = $region65
    $region64: #{tpu_custom_call.1} parent=1 // pred_region
      %s1962 = ssub.s32 16, 16
      %1963 = vsyncadd [#allocation4], %s1962
      %1966 = dma.smem_to_hbm [#allocation13], 16, %s9, [#allocation4]
    $region65: #{tpu_custom_call.1} parent=1 // pred_fallthru
      _
    // Predicated region
    $region66: #{tpu_custom_call.1} parent=1 // pred_check
      _
    $region67: #{tpu_custom_call.1} parent=1 // pred_check_branch
      %1968 = sbr.rel (0) target = $region69
    $region68: #{tpu_custom_call.1} parent=1 // pred_region
      %1969 = dma.done [#allocation4], 16
    $region69: #{tpu_custom_call.1} parent=1 // pred_fallthru
      _
    %1970 = sfence
    %1971 = vsyncpa [#allocation3], 1
    %1972 = vsyncpa [#allocation6], 1
    %1973 = vsyncpa [#allocation9], 1
    %1974 = vsyncpa [#allocation12], 1
    %1975 = vsyncpa [#allocation4], 1

</llo_original>
